<compile_context>
chip_gen: v7x
topology: tpu7x:2x2x1
jax: 0.10.0
libtpu: 0.0.40
codegen_flags: <defaults>
</compile_context>

<pallas_src>
import functools

import jax
import jax.numpy as jnp
from jax.experimental import pallas as pl
from jax.experimental.pallas import tpu as pltpu

N_IN = 784
LAYER_LIST = [256, 128, 64, 32, 10]
N_OUT = LAYER_LIST[-1]

# Kernel-facing (padded) layer boundary dims: hidden 64/32 -> 128, classes -> 16.
ORIG_DIMS = [N_IN] + LAYER_LIST                      # [784, 256, 128, 64, 32, 10]
PAD_DIMS = [784, 256, 128, 128, 128, 16]
N_OUT_PAD = PAD_DIMS[-1]

BIAS_FILL = 0.0
NEG_BIG = -1e30            # effectively -inf for padded class columns (safe in f32)


def _round_up(x, m):
    return (x + m - 1) // m * m


def _choose_tile(b_pad, batch_tile):
    """Largest 128-multiple divisor of b_pad that is <= batch_tile, with the
    extra constraint that the grid has >= 2 blocks whenever b_pad >= 256 (so
    the 'parallel' batch axis can be sharded across both v7x TensorCores)."""
    n = b_pad // 128
    max_k = max(1, min(batch_tile // 128, n))
    if n >= 2:
        max_k = min(max_k, n // 2)          # guarantee grid >= 2
        max_k = max(max_k, 1)
    k = 1
    for cand in range(1, max_k + 1):
        if n % cand == 0:
            k = cand
    return 128 * k


def mlp_kernel(x_ref,
               w1, b1, w2, b2, w3, b3, w4, b4, w5, b5,
               out_ref):
    """Whole MLP forward + log_softmax for one batch tile, all in VMEM.

    x enters as f32 and is cast to bf16 in VMEM; matmuls run bf16 on the MXU
    with f32 accumulation; bias add, ReLU and log_softmax stay in f32."""
    h = x_ref[...].astype(jnp.bfloat16)               # (tile, 784) bf16

    def hidden(h, w, b):
        a = jnp.dot(h, w[...], preferred_element_type=jnp.float32) + b[...]
        return jnp.maximum(a, 0.0).astype(jnp.bfloat16)

    h = hidden(h, w1, b1)
    h = hidden(h, w2, b2)
    h = hidden(h, w3, b3)
    h = hidden(h, w4, b4)

    # Final linear: classes padded to 16; padded columns carry a huge negative
    # bias so exp() underflows to exactly 0 and they drop out of the softmax.
    logits = jnp.dot(h, w5[...], preferred_element_type=jnp.float32) + b5[...]

    # log_softmax(dim=1) in f32
    m = jnp.max(logits, axis=-1, keepdims=True)
    shifted = logits - m
    lse = jnp.log(jnp.sum(jnp.exp(shifted), axis=-1, keepdims=True))
    out_ref[...] = (shifted - lse).astype(out_ref.dtype)


def init_params(key, n_in=N_IN, layer_list=LAYER_LIST, bias=BIAS_FILL):
    """He-normal weights (std = sqrt(2 / fan_in)), constant bias — mirrors
    MNIST_classifier.init_weights. Weights stored as (fan_in, fan_out) so the
    kernel does x @ W (torch stores (out, in) and does x @ W.T — same math)."""
    dims = [n_in] + list(layer_list)
    params = []
    for i in range(len(dims) - 1):
        key, sub = jax.random.split(key)
        fan_in, fan_out = dims[i], dims[i + 1]
        w = jax.random.normal(sub, (fan_in, fan_out), dtype=jnp.float32) \
            * jnp.sqrt(2.0 / fan_in)
        b = jnp.full((1, fan_out), bias, dtype=jnp.float32)
        params.append((w, b))
    return params


def prepare_params(params):
    """One-time (outside jit) weight preprocessing: pad hidden dims to the
    kernel-facing PAD_DIMS with zeros (padded rows/cols contribute exactly 0),
    pad the class dim to 16 with NEG_BIG bias, cast weights to bf16."""
    flat = []
    n_layers = len(params)
    for i, (w, b) in enumerate(params):
        w = jnp.asarray(w, dtype=jnp.float32)
        b = jnp.asarray(b, dtype=jnp.float32).reshape(1, -1)
        fi, fo = w.shape
        pi, po = PAD_DIMS[i], PAD_DIMS[i + 1]
        w = jnp.pad(w, ((0, pi - fi), (0, po - fo)))
        if i == n_layers - 1:
            b = jnp.pad(b, ((0, 0), (0, po - fo)), constant_values=NEG_BIG)
        else:
            b = jnp.pad(b, ((0, 0), (0, po - fo)))
        flat.append(w.astype(jnp.bfloat16))
        flat.append(b)                                  # biases stay f32
    return tuple(flat)


@functools.partial(jax.jit, static_argnames=("batch_tile",))
def mnist_classifier_forward(x, flat_params, *, batch_tile=1024):
    # Flatten exactly like torch's x.view(-1, n_in); stay in f32 (bf16 cast
    # happens inside the kernel — avoids an extra HBM pass over x).
    x2d = x.reshape(-1, N_IN).astype(jnp.float32)
    B = x2d.shape[0]

    # Pad batch only to a multiple of 128; pick a tile that divides it exactly
    # and keeps the grid >= 2 when possible (v7x megacore).
    B_pad = _round_up(B, 128)
    x2d = jnp.pad(x2d, ((0, B_pad - B), (0, 0)))
    tile = _choose_tile(B_pad, batch_tile)
    grid = B_pad // tile

    def full_spec(arr):
        shape = arr.shape
        return pl.BlockSpec(shape, lambda i: (0,) * len(shape))

    in_specs = [pl.BlockSpec((tile, N_IN), lambda i: (i, 0))]
    in_specs += [full_spec(a) for a in flat_params]
    out_spec = pl.BlockSpec((tile, N_OUT_PAD), lambda i: (i, 0))

    # Advisory cost estimate for XLA's scheduler.
    matmul_flops = 2 * B_pad * sum(PAD_DIMS[i] * PAD_DIMS[i + 1]
                                   for i in range(len(PAD_DIMS) - 1))
    weight_bytes = sum(int(a.size) * a.dtype.itemsize for a in flat_params)
    cost = pl.CostEstimate(
        flops=matmul_flops,
        transcendentals=B_pad * (N_OUT_PAD + 1),
        bytes_accessed=B_pad * N_IN * 4 + weight_bytes + B_pad * N_OUT_PAD * 4,
    )

    out = pl.pallas_call(
        mlp_kernel,
        out_shape=jax.ShapeDtypeStruct((B_pad, N_OUT_PAD), jnp.float32),
        grid_spec=pl.GridSpec(
            grid=(grid,),
            in_specs=in_specs,
            out_specs=out_spec,
        ),
        compiler_params=pltpu.CompilerParams(
            dimension_semantics=("parallel",),
            vmem_limit_bytes=32 * 1024 * 1024,
        ),
        cost_estimate=cost,
    )(x2d, *flat_params)

    return out[:B, :N_OUT]


def reference_forward(x, params):
    """Pure-JAX f32 reference matching the torch module's forward."""
    h = x.reshape(-1, N_IN).astype(jnp.float32)
    for i, (w, b) in enumerate(params):
        h = h @ w + b
        if i < len(params) - 1:
            h = jnp.maximum(h, 0.0)
    return jax.nn.log_softmax(h, axis=-1)


if __name__ == "__main__":
    key = jax.random.PRNGKey(0)
    pkey, xkey = jax.random.split(key)

    params = init_params(pkey)
    flat_params = prepare_params(params)      # one-time, outside jit

    # Small deterministic example input, NCHW like a torch MNIST batch.
    batch = 8
    x = jax.random.normal(xkey, (batch, 1, 28, 28), dtype=jnp.float32)

    out = mnist_classifier_forward(x, flat_params)
    out = jax.block_until_ready(out)

    assert out.shape == (batch, N_OUT)

    # Sanity: softmax rows should sum to ~1 (normalization happens in f32).
    row_sums = jnp.sum(jnp.exp(out), axis=-1)
    assert bool(jnp.all(jnp.abs(row_sums - 1.0) < 1e-3))

    # Loose agreement with an f32 reference (bf16 MXU inputs drift slightly).
    ref = reference_forward(x, params)
    assert bool(jnp.max(jnp.abs(out - ref)) < 0.5)

    print("KERNEL_OK")
</pallas_src>

<mosaic_0001>
module attributes {stable_mosaic.version = 11 : i64} {
  func.func @mlp_kernel(%arg0: i32, %arg1: memref<128x784xf32, #tpu.memory_space<vmem>>, %arg2: memref<784x256xbf16, #tpu.memory_space<vmem>>, %arg3: memref<1x256xf32, #tpu.memory_space<vmem>>, %arg4: memref<256x128xbf16, #tpu.memory_space<vmem>>, %arg5: memref<1x128xf32, #tpu.memory_space<vmem>>, %arg6: memref<128x128xbf16, #tpu.memory_space<vmem>>, %arg7: memref<1x128xf32, #tpu.memory_space<vmem>>, %arg8: memref<128x128xbf16, #tpu.memory_space<vmem>>, %arg9: memref<1x128xf32, #tpu.memory_space<vmem>>, %arg10: memref<128x16xbf16, #tpu.memory_space<vmem>>, %arg11: memref<1x16xf32, #tpu.memory_space<vmem>>, %arg12: memref<128x16xf32, #tpu.memory_space<vmem>>) attributes {dimension_semantics = [#tpu.dimension_semantics<parallel>], iteration_bounds = array<i64: 1>, scalar_prefetch = 0 : i64, scratch_operands = 0 : i64, tpu.core_type = #tpu.core_type<tc>, window_params = [{transform_indices = @transform_0, window_bounds = array<i64: 128, 784>}, {pipeline_mode = #tpu.pipeline_mode<synchronous>, transform_indices = @transform_1, window_bounds = array<i64: 784, 256>}, {pipeline_mode = #tpu.pipeline_mode<synchronous>, transform_indices = @transform_2, window_bounds = array<i64: 1, 256>}, {pipeline_mode = #tpu.pipeline_mode<synchronous>, transform_indices = @transform_3, window_bounds = array<i64: 256, 128>}, {pipeline_mode = #tpu.pipeline_mode<synchronous>, transform_indices = @transform_4, window_bounds = array<i64: 1, 128>}, {pipeline_mode = #tpu.pipeline_mode<synchronous>, transform_indices = @transform_5, window_bounds = array<i64: 128, 128>}, {pipeline_mode = #tpu.pipeline_mode<synchronous>, transform_indices = @transform_6, window_bounds = array<i64: 1, 128>}, {pipeline_mode = #tpu.pipeline_mode<synchronous>, transform_indices = @transform_7, window_bounds = array<i64: 128, 128>}, {pipeline_mode = #tpu.pipeline_mode<synchronous>, transform_indices = @transform_8, window_bounds = array<i64: 1, 128>}, {pipeline_mode = #tpu.pipeline_mode<synchronous>, transform_indices = @transform_9, window_bounds = array<i64: 128, 16>}, {pipeline_mode = #tpu.pipeline_mode<synchronous>, transform_indices = @transform_10, window_bounds = array<i64: 1, 16>}, {transform_indices = @transform_11, window_bounds = array<i64: 128, 16>}]} {
    %c0 = arith.constant 0 : index
    %c0_0 = arith.constant 0 : index
    %0 = vector.load %arg1[%c0, %c0_0] : memref<128x784xf32, #tpu.memory_space<vmem>>, vector<128x784xf32>
    %1 = arith.truncf %0 : vector<128x784xf32> to vector<128x784xbf16>
    %c0_1 = arith.constant 0 : index
    %c0_2 = arith.constant 0 : index
    %2 = vector.load %arg2[%c0_1, %c0_2] : memref<784x256xbf16, #tpu.memory_space<vmem>>, vector<784x256xbf16>
    %cst = arith.constant dense<0.000000e+00> : vector<128x256xf32>
    %3 = tpu.matmul %1, %2, %cst {dimension_numbers = #tpu.dot_dimension_numbers<[1], [0], [0], [1], [0, 0, 1, 1], [], []>} : vector<128x784xbf16>, vector<784x256xbf16>, vector<128x256xf32> -> vector<128x256xf32>
    %c0_3 = arith.constant 0 : index
    %c0_4 = arith.constant 0 : index
    %4 = vector.load %arg3[%c0_3, %c0_4] : memref<1x256xf32, #tpu.memory_space<vmem>>, vector<1x256xf32>
    %5 = vector.broadcast %4 : vector<1x256xf32> to vector<128x256xf32>
    %6 = arith.addf %3, %5 : vector<128x256xf32>
    %cst_5 = arith.constant 0.000000e+00 : f32
    %7 = vector.broadcast %cst_5 : f32 to vector<128x256xf32>
    %8 = arith.maximumf %6, %7 : vector<128x256xf32>
    %9 = arith.truncf %8 : vector<128x256xf32> to vector<128x256xbf16>
    %c0_6 = arith.constant 0 : index
    %c0_7 = arith.constant 0 : index
    %10 = vector.load %arg4[%c0_6, %c0_7] : memref<256x128xbf16, #tpu.memory_space<vmem>>, vector<256x128xbf16>
    %cst_8 = arith.constant dense<0.000000e+00> : vector<128x128xf32>
    %11 = tpu.matmul %9, %10, %cst_8 {dimension_numbers = #tpu.dot_dimension_numbers<[1], [0], [0], [1], [0, 0, 1, 1], [], []>} : vector<128x256xbf16>, vector<256x128xbf16>, vector<128x128xf32> -> vector<128x128xf32>
    %c0_9 = arith.constant 0 : index
    %c0_10 = arith.constant 0 : index
    %12 = vector.load %arg5[%c0_9, %c0_10] : memref<1x128xf32, #tpu.memory_space<vmem>>, vector<1x128xf32>
    %13 = vector.broadcast %12 : vector<1x128xf32> to vector<128x128xf32>
    %14 = arith.addf %11, %13 : vector<128x128xf32>
    %cst_11 = arith.constant 0.000000e+00 : f32
    %15 = vector.broadcast %cst_11 : f32 to vector<128x128xf32>
    %16 = arith.maximumf %14, %15 : vector<128x128xf32>
    %17 = arith.truncf %16 : vector<128x128xf32> to vector<128x128xbf16>
    %c0_12 = arith.constant 0 : index
    %c0_13 = arith.constant 0 : index
    %18 = vector.load %arg6[%c0_12, %c0_13] : memref<128x128xbf16, #tpu.memory_space<vmem>>, vector<128x128xbf16>
    %cst_14 = arith.constant dense<0.000000e+00> : vector<128x128xf32>
    %19 = tpu.matmul %17, %18, %cst_14 {dimension_numbers = #tpu.dot_dimension_numbers<[1], [0], [0], [1], [0, 0, 1, 1], [], []>} : vector<128x128xbf16>, vector<128x128xbf16>, vector<128x128xf32> -> vector<128x128xf32>
    %c0_15 = arith.constant 0 : index
    %c0_16 = arith.constant 0 : index
    %20 = vector.load %arg7[%c0_15, %c0_16] : memref<1x128xf32, #tpu.memory_space<vmem>>, vector<1x128xf32>
    %21 = vector.broadcast %20 : vector<1x128xf32> to vector<128x128xf32>
    %22 = arith.addf %19, %21 : vector<128x128xf32>
    %cst_17 = arith.constant 0.000000e+00 : f32
    %23 = vector.broadcast %cst_17 : f32 to vector<128x128xf32>
    %24 = arith.maximumf %22, %23 : vector<128x128xf32>
    %25 = arith.truncf %24 : vector<128x128xf32> to vector<128x128xbf16>
    %c0_18 = arith.constant 0 : index
    %c0_19 = arith.constant 0 : index
    %26 = vector.load %arg8[%c0_18, %c0_19] : memref<128x128xbf16, #tpu.memory_space<vmem>>, vector<128x128xbf16>
    %cst_20 = arith.constant dense<0.000000e+00> : vector<128x128xf32>
    %27 = tpu.matmul %25, %26, %cst_20 {dimension_numbers = #tpu.dot_dimension_numbers<[1], [0], [0], [1], [0, 0, 1, 1], [], []>} : vector<128x128xbf16>, vector<128x128xbf16>, vector<128x128xf32> -> vector<128x128xf32>
    %c0_21 = arith.constant 0 : index
    %c0_22 = arith.constant 0 : index
    %28 = vector.load %arg9[%c0_21, %c0_22] : memref<1x128xf32, #tpu.memory_space<vmem>>, vector<1x128xf32>
    %29 = vector.broadcast %28 : vector<1x128xf32> to vector<128x128xf32>
    %30 = arith.addf %27, %29 : vector<128x128xf32>
    %cst_23 = arith.constant 0.000000e+00 : f32
    %31 = vector.broadcast %cst_23 : f32 to vector<128x128xf32>
    %32 = arith.maximumf %30, %31 : vector<128x128xf32>
    %33 = arith.truncf %32 : vector<128x128xf32> to vector<128x128xbf16>
    %c0_24 = arith.constant 0 : index
    %c0_25 = arith.constant 0 : index
    %34 = vector.load %arg10[%c0_24, %c0_25] : memref<128x16xbf16, #tpu.memory_space<vmem>>, vector<128x16xbf16>
    %cst_26 = arith.constant dense<0.000000e+00> : vector<128x16xf32>
    %35 = tpu.matmul %33, %34, %cst_26 {dimension_numbers = #tpu.dot_dimension_numbers<[1], [0], [0], [1], [0, 0, 1, 1], [], []>} : vector<128x128xbf16>, vector<128x16xbf16>, vector<128x16xf32> -> vector<128x16xf32>
    %c0_27 = arith.constant 0 : index
    %c0_28 = arith.constant 0 : index
    %36 = vector.load %arg11[%c0_27, %c0_28] : memref<1x16xf32, #tpu.memory_space<vmem>>, vector<1x16xf32>
    %37 = vector.broadcast %36 : vector<1x16xf32> to vector<128x16xf32>
    %38 = arith.addf %35, %37 : vector<128x16xf32>
    %cst_29 = arith.constant dense<0xFF800000> : vector<128xf32>
    %39 = vector.multi_reduction <maximumf>, %38, %cst_29 [1] : vector<128x16xf32> to vector<128xf32>
    %40 = vector.shape_cast %39 : vector<128xf32> to vector<128x1xf32>
    %41 = vector.broadcast %40 : vector<128x1xf32> to vector<128x16xf32>
    %42 = arith.subf %38, %41 : vector<128x16xf32>
    %43 = math.exp %42 : vector<128x16xf32>
    %cst_30 = arith.constant dense<0.000000e+00> : vector<128xf32>
    %44 = vector.multi_reduction <add>, %43, %cst_30 [1] : vector<128x16xf32> to vector<128xf32>
    %45 = vector.shape_cast %44 : vector<128xf32> to vector<128x1xf32>
    %46 = math.log %45 : vector<128x1xf32>
    %47 = vector.broadcast %46 : vector<128x1xf32> to vector<128x16xf32>
    %48 = arith.subf %42, %47 : vector<128x16xf32>
    %c0_31 = arith.constant 0 : index
    %c0_32 = arith.constant 0 : index
    %49 = vector.load %arg12[%c0_31, %c0_32] : memref<128x16xf32, #tpu.memory_space<vmem>>, vector<128x16xf32>
    tpu.vector_store %arg12[%c0_31, %c0_32], %48 {strides = array<i32>} : memref<128x16xf32, #tpu.memory_space<vmem>>, vector<128x16xf32>,
    return
  }
  func.func @transform_0(%arg0: i32) -> (i32, i32) {
    %c0_i32 = arith.constant 0 : i32
    %c0_i32_0 = arith.constant 0 : i32
    return %arg0, %c0_i32 : i32, i32
  }
  func.func @transform_1(%arg0: i32) -> (i32, i32) {
    %c0_i32 = arith.constant 0 : i32
    %c0_i32_0 = arith.constant 0 : i32
    %c0_i32_1 = arith.constant 0 : i32
    return %c0_i32, %c0_i32_0 : i32, i32
  }
  func.func @transform_2(%arg0: i32) -> (i32, i32) {
    %c0_i32 = arith.constant 0 : i32
    %c0_i32_0 = arith.constant 0 : i32
    %c0_i32_1 = arith.constant 0 : i32
    return %c0_i32, %c0_i32_0 : i32, i32
  }
  func.func @transform_3(%arg0: i32) -> (i32, i32) {
    %c0_i32 = arith.constant 0 : i32
    %c0_i32_0 = arith.constant 0 : i32
    %c0_i32_1 = arith.constant 0 : i32
    return %c0_i32, %c0_i32_0 : i32, i32
  }
  func.func @transform_4(%arg0: i32) -> (i32, i32) {
    %c0_i32 = arith.constant 0 : i32
    %c0_i32_0 = arith.constant 0 : i32
    %c0_i32_1 = arith.constant 0 : i32
    return %c0_i32, %c0_i32_0 : i32, i32
  }
  func.func @transform_5(%arg0: i32) -> (i32, i32) {
    %c0_i32 = arith.constant 0 : i32
    %c0_i32_0 = arith.constant 0 : i32
    %c0_i32_1 = arith.constant 0 : i32
    return %c0_i32, %c0_i32_0 : i32, i32
  }
  func.func @transform_6(%arg0: i32) -> (i32, i32) {
    %c0_i32 = arith.constant 0 : i32
    %c0_i32_0 = arith.constant 0 : i32
    %c0_i32_1 = arith.constant 0 : i32
    return %c0_i32, %c0_i32_0 : i32, i32
  }
  func.func @transform_7(%arg0: i32) -> (i32, i32) {
    %c0_i32 = arith.constant 0 : i32
    %c0_i32_0 = arith.constant 0 : i32
    %c0_i32_1 = arith.constant 0 : i32
    return %c0_i32, %c0_i32_0 : i32, i32
  }
  func.func @transform_8(%arg0: i32) -> (i32, i32) {
    %c0_i32 = arith.constant 0 : i32
    %c0_i32_0 = arith.constant 0 : i32
    %c0_i32_1 = arith.constant 0 : i32
    return %c0_i32, %c0_i32_0 : i32, i32
  }
  func.func @transform_9(%arg0: i32) -> (i32, i32) {
    %c0_i32 = arith.constant 0 : i32
    %c0_i32_0 = arith.constant 0 : i32
    %c0_i32_1 = arith.constant 0 : i32
    return %c0_i32, %c0_i32_0 : i32, i32
  }
  func.func @transform_10(%arg0: i32) -> (i32, i32) {
    %c0_i32 = arith.constant 0 : i32
    %c0_i32_0 = arith.constant 0 : i32
    %c0_i32_1 = arith.constant 0 : i32
    return %c0_i32, %c0_i32_0 : i32, i32
  }
  func.func @transform_11(%arg0: i32) -> (i32, i32) {
    %c0_i32 = arith.constant 0 : i32
    %c0_i32_0 = arith.constant 0 : i32
    return %arg0, %c0_i32 : i32, i32
  }
}

</mosaic_0001>

<llo_original>
// kernel: mnist_classifier_forward.1
$region0: #{mnist_classifier_forward.1}
  #allocation0 [shape = 'u32[]', space=smem, size = 0x4, offset = 0x4, fixed_abs, tag = 'smem constant byte address 0x4 - core index']
  #allocation1 [shape = 'u32[144,128]{1,0:T(1,128)}', space=vmem, size = 0x12000, scoped, tag = 'internal scratch']
  %s0 = inlined_call_operand.vmem [shape: f32[128,784], index: 0, kind: input, shape index: {}]
  %s1 = inlined_call_operand.vmem [shape: bf16[784,256], index: 1, kind: input, shape index: {}]
  %s2 = inlined_call_operand.vmem [shape: f32[1,256], index: 2, kind: input, shape index: {}]
  %s3 = inlined_call_operand.vmem [shape: bf16[256,128], index: 3, kind: input, shape index: {}]
  %s4 = inlined_call_operand.vmem [shape: f32[1,128], index: 4, kind: input, shape index: {}]
  %s5 = inlined_call_operand.vmem [shape: bf16[128,128], index: 5, kind: input, shape index: {}]
  %s6 = inlined_call_operand.vmem [shape: f32[1,128], index: 6, kind: input, shape index: {}]
  %s7 = inlined_call_operand.vmem [shape: bf16[128,128], index: 7, kind: input, shape index: {}]
  %s8 = inlined_call_operand.vmem [shape: f32[1,128], index: 8, kind: input, shape index: {}]
  %s9 = inlined_call_operand.vmem [shape: bf16[128,16], index: 9, kind: input, shape index: {}]
  %s10 = inlined_call_operand.vmem [shape: f32[1,16], index: 10, kind: input, shape index: {}]
  %s11 = inlined_call_operand.vmem [shape: f32[128,16], index: 11, kind: output, shape index: {}]
  %s12 = sld [smem:[#allocation0]]
  $region54: #{mnist_classifier_forward.1} parent=0
    _
  %s14 = ssub.s32 1, %s12
  %s15 = scalar_select 0, %s14, %s12
  // Predicated region
  $region2: #{mnist_classifier_forward.1} parent=0 // pred_check
    _
  $region3: #{mnist_classifier_forward.1} parent=0 // pred_check_branch
    %17 = sbr.rel (0) target = $region5
  $region4: #{mnist_classifier_forward.1} parent=0 // pred_region
    _
  $region5: #{mnist_classifier_forward.1} parent=0 // pred_fallthru
    _
  // Predicated region
  $region6: #{mnist_classifier_forward.1} parent=0 // pred_check
    _
  $region7: #{mnist_classifier_forward.1} parent=0 // pred_check_branch
    %19 = sbr.rel (0) target = $region9
  $region8: #{mnist_classifier_forward.1} parent=0 // pred_region
    _
  $region9: #{mnist_classifier_forward.1} parent=0 // pred_fallthru
    _
  // Predicated region
  $region10: #{mnist_classifier_forward.1} parent=0 // pred_check
    _
  $region11: #{mnist_classifier_forward.1} parent=0 // pred_check_branch
    %21 = sbr.rel (0) target = $region13
  $region12: #{mnist_classifier_forward.1} parent=0 // pred_region
    _
  $region13: #{mnist_classifier_forward.1} parent=0 // pred_fallthru
    _
  // Predicated region
  $region14: #{mnist_classifier_forward.1} parent=0 // pred_check
    _
  $region15: #{mnist_classifier_forward.1} parent=0 // pred_check_branch
    %23 = sbr.rel (0) target = $region17
  $region16: #{mnist_classifier_forward.1} parent=0 // pred_region
    _
  $region17: #{mnist_classifier_forward.1} parent=0 // pred_fallthru
    _
  // Predicated region
  $region18: #{mnist_classifier_forward.1} parent=0 // pred_check
    _
  $region19: #{mnist_classifier_forward.1} parent=0 // pred_check_branch
    %25 = sbr.rel (0) target = $region21
  $region20: #{mnist_classifier_forward.1} parent=0 // pred_region
    _
  $region21: #{mnist_classifier_forward.1} parent=0 // pred_fallthru
    _
  // Predicated region
  $region22: #{mnist_classifier_forward.1} parent=0 // pred_check
    _
  $region23: #{mnist_classifier_forward.1} parent=0 // pred_check_branch
    %27 = sbr.rel (0) target = $region25
  $region24: #{mnist_classifier_forward.1} parent=0 // pred_region
    _
  $region25: #{mnist_classifier_forward.1} parent=0 // pred_fallthru
    _
  // Predicated region
  $region26: #{mnist_classifier_forward.1} parent=0 // pred_check
    _
  $region27: #{mnist_classifier_forward.1} parent=0 // pred_check_branch
    %29 = sbr.rel (0) target = $region29
  $region28: #{mnist_classifier_forward.1} parent=0 // pred_region
    _
  $region29: #{mnist_classifier_forward.1} parent=0 // pred_fallthru
    _
  // Predicated region
  $region30: #{mnist_classifier_forward.1} parent=0 // pred_check
    _
  $region31: #{mnist_classifier_forward.1} parent=0 // pred_check_branch
    %31 = sbr.rel (0) target = $region33
  $region32: #{mnist_classifier_forward.1} parent=0 // pred_region
    _
  $region33: #{mnist_classifier_forward.1} parent=0 // pred_fallthru
    _
  // Predicated region
  $region34: #{mnist_classifier_forward.1} parent=0 // pred_check
    _
  $region35: #{mnist_classifier_forward.1} parent=0 // pred_check_branch
    %33 = sbr.rel (0) target = $region37
  $region36: #{mnist_classifier_forward.1} parent=0 // pred_region
    _
  $region37: #{mnist_classifier_forward.1} parent=0 // pred_fallthru
    _
  // Predicated region
  $region38: #{mnist_classifier_forward.1} parent=0 // pred_check
    _
  $region39: #{mnist_classifier_forward.1} parent=0 // pred_check_branch
    %35 = sbr.rel (0) target = $region41
  $region40: #{mnist_classifier_forward.1} parent=0 // pred_region
    _
  $region41: #{mnist_classifier_forward.1} parent=0 // pred_fallthru
    _
  // Predicated region
  $region42: #{mnist_classifier_forward.1} parent=0 // pred_check
    _
  $region43: #{mnist_classifier_forward.1} parent=0 // pred_check_branch
    %37 = sbr.rel (0) target = $region45
  $region44: #{mnist_classifier_forward.1} parent=0 // pred_region
    _
  $region45: #{mnist_classifier_forward.1} parent=0 // pred_fallthru
    _
  %v39 = vld [vmem:[%s0] sm:$0xff]
  %v40 = vld [vmem:[%s0 + $0x8] sm:$0xff]
  %v41 = vld [vmem:[%s0 + $0x10] sm:$0xff]
  %v42 = vld [vmem:[%s0 + $0x18] sm:$0xff]
  %v43 = vld [vmem:[%s0 + $0x20] sm:$0xff]
  %v44 = vld [vmem:[%s0 + $0x28] sm:$0xff]
  %v45 = vld [vmem:[%s0 + $0x30] sm:$0xff]
  %v46 = vld [vmem:[%s0 + $0x38] sm:$0xff]
  %v47 = vld [vmem:[%s0 + $0x40] sm:$0xff]
  %v48 = vld [vmem:[%s0 + $0x48] sm:$0xff]
  %v49 = vld [vmem:[%s0 + $0x50] sm:$0xff]
  %v50 = vld [vmem:[%s0 + $0x58] sm:$0xff]
  %v51 = vld [vmem:[%s0 + $0x60] sm:$0xff]
  %v52 = vld [vmem:[%s0 + $0x68] sm:$0xff]
  %v53 = vld [vmem:[%s0 + $0x70] sm:$0xff]
  %v54 = vld [vmem:[%s0 + $0x78] sm:$0xff]
  %v55 = vld [vmem:[%s0 + $0x80] sm:$0xff]
  %v56 = vld [vmem:[%s0 + $0x88] sm:$0xff]
  %v57 = vld [vmem:[%s0 + $0x90] sm:$0xff]
  %v58 = vld [vmem:[%s0 + $0x98] sm:$0xff]
  %v59 = vld [vmem:[%s0 + $0xa0] sm:$0xff]
  %v60 = vld [vmem:[%s0 + $0xa8] sm:$0xff]
  %v61 = vld [vmem:[%s0 + $0xb0] sm:$0xff]
  %v62 = vld [vmem:[%s0 + $0xb8] sm:$0xff]
  %v63 = vld [vmem:[%s0 + $0xc0] sm:$0xff]
  %v64 = vld [vmem:[%s0 + $0xc8] sm:$0xff]
  %v65 = vld [vmem:[%s0 + $0xd0] sm:$0xff]
  %v66 = vld [vmem:[%s0 + $0xd8] sm:$0xff]
  %v67 = vld [vmem:[%s0 + $0xe0] sm:$0xff]
  %v68 = vld [vmem:[%s0 + $0xe8] sm:$0xff]
  %v69 = vld [vmem:[%s0 + $0xf0] sm:$0xff]
  %v70 = vld [vmem:[%s0 + $0xf8] sm:$0xff]
  %v71 = vld [vmem:[%s0 + $0x100] sm:$0xff]
  %v72 = vld [vmem:[%s0 + $0x108] sm:$0xff]
  %v73 = vld [vmem:[%s0 + $0x110] sm:$0xff]
  %v74 = vld [vmem:[%s0 + $0x118] sm:$0xff]
  %v75 = vld [vmem:[%s0 + $0x120] sm:$0xff]
  %v76 = vld [vmem:[%s0 + $0x128] sm:$0xff]
  %v77 = vld [vmem:[%s0 + $0x130] sm:$0xff]
  %v78 = vld [vmem:[%s0 + $0x138] sm:$0xff]
  %v79 = vld [vmem:[%s0 + $0x140] sm:$0xff]
  %v80 = vld [vmem:[%s0 + $0x148] sm:$0xff]
  %v81 = vld [vmem:[%s0 + $0x150] sm:$0xff]
  %v82 = vld [vmem:[%s0 + $0x158] sm:$0xff]
  %v83 = vld [vmem:[%s0 + $0x160] sm:$0xff]
  %v84 = vld [vmem:[%s0 + $0x168] sm:$0xff]
  %v85 = vld [vmem:[%s0 + $0x170] sm:$0xff]
  %v86 = vld [vmem:[%s0 + $0x178] sm:$0xff]
  %v87 = vld [vmem:[%s0 + $0x180] sm:$0xff]
  %v88 = vld [vmem:[%s0 + $0x188] sm:$0xff]
  %v89 = vld [vmem:[%s0 + $0x190] sm:$0xff]
  %v90 = vld [vmem:[%s0 + $0x198] sm:$0xff]
  %v91 = vld [vmem:[%s0 + $0x1a0] sm:$0xff]
  %v92 = vld [vmem:[%s0 + $0x1a8] sm:$0xff]
  %v93 = vld [vmem:[%s0 + $0x1b0] sm:$0xff]
  %v94 = vld [vmem:[%s0 + $0x1b8] sm:$0xff]
  %v95 = vld [vmem:[%s0 + $0x1c0] sm:$0xff]
  %v96 = vld [vmem:[%s0 + $0x1c8] sm:$0xff]
  %v97 = vld [vmem:[%s0 + $0x1d0] sm:$0xff]
  %v98 = vld [vmem:[%s0 + $0x1d8] sm:$0xff]
  %v99 = vld [vmem:[%s0 + $0x1e0] sm:$0xff]
  %v100 = vld [vmem:[%s0 + $0x1e8] sm:$0xff]
  %v101 = vld [vmem:[%s0 + $0x1f0] sm:$0xff]
  %v102 = vld [vmem:[%s0 + $0x1f8] sm:$0xff]
  %v103 = vld [vmem:[%s0 + $0x200] sm:$0xff]
  %v104 = vld [vmem:[%s0 + $0x208] sm:$0xff]
  %v105 = vld [vmem:[%s0 + $0x210] sm:$0xff]
  %v106 = vld [vmem:[%s0 + $0x218] sm:$0xff]
  %v107 = vld [vmem:[%s0 + $0x220] sm:$0xff]
  %v108 = vld [vmem:[%s0 + $0x228] sm:$0xff]
  %v109 = vld [vmem:[%s0 + $0x230] sm:$0xff]
  %v110 = vld [vmem:[%s0 + $0x238] sm:$0xff]
  %v111 = vld [vmem:[%s0 + $0x240] sm:$0xff]
  %v112 = vld [vmem:[%s0 + $0x248] sm:$0xff]
  %v113 = vld [vmem:[%s0 + $0x250] sm:$0xff]
  %v114 = vld [vmem:[%s0 + $0x258] sm:$0xff]
  %v115 = vld [vmem:[%s0 + $0x260] sm:$0xff]
  %v116 = vld [vmem:[%s0 + $0x268] sm:$0xff]
  %v117 = vld [vmem:[%s0 + $0x270] sm:$0xff]
  %v118 = vld [vmem:[%s0 + $0x278] sm:$0xff]
  %v119 = vld [vmem:[%s0 + $0x280] sm:$0xff]
  %v120 = vld [vmem:[%s0 + $0x288] sm:$0xff]
  %v121 = vld [vmem:[%s0 + $0x290] sm:$0xff]
  %v122 = vld [vmem:[%s0 + $0x298] sm:$0xff]
  %v123 = vld [vmem:[%s0 + $0x2a0] sm:$0xff]
  %v124 = vld [vmem:[%s0 + $0x2a8] sm:$0xff]
  %v125 = vld [vmem:[%s0 + $0x2b0] sm:$0xff]
  %v126 = vld [vmem:[%s0 + $0x2b8] sm:$0xff]
  %v127 = vld [vmem:[%s0 + $0x2c0] sm:$0xff]
  %v128 = vld [vmem:[%s0 + $0x2c8] sm:$0xff]
  %v129 = vld [vmem:[%s0 + $0x2d0] sm:$0xff]
  %v130 = vld [vmem:[%s0 + $0x2d8] sm:$0xff]
  %v131 = vld [vmem:[%s0 + $0x2e0] sm:$0xff]
  %v132 = vld [vmem:[%s0 + $0x2e8] sm:$0xff]
  %v133 = vld [vmem:[%s0 + $0x2f0] sm:$0xff]
  %v134 = vld [vmem:[%s0 + $0x2f8] sm:$0xff]
  %v135 = vld [vmem:[%s0 + $0x300] sm:$0xff]
  %v136 = vld [vmem:[%s0 + $0x308] sm:$0xff]
  %v137 = vld [vmem:[%s0 + $0x310] sm:$0xff]
  %v138 = vld [vmem:[%s0 + $0x318] sm:$0xff]
  %v139 = vld [vmem:[%s0 + $0x320] sm:$0xff]
  %v140 = vld [vmem:[%s0 + $0x328] sm:$0xff]
  %v141 = vld [vmem:[%s0 + $0x330] sm:$0xff]
  %v142 = vld [vmem:[%s0 + $0x338] sm:$0xff]
  %v143 = vld [vmem:[%s0 + $0x340] sm:$0xff]
  %v144 = vld [vmem:[%s0 + $0x348] sm:$0xff]
  %v145 = vld [vmem:[%s0 + $0x350] sm:$0xff]
  %v146 = vld [vmem:[%s0 + $0x358] sm:$0xff]
  %v147 = vld [vmem:[%s0 + $0x360] sm:$0xff]
  %v148 = vld [vmem:[%s0 + $0x368] sm:$0xff]
  %v149 = vld [vmem:[%s0 + $0x370] sm:$0xff]
  %v150 = vld [vmem:[%s0 + $0x378] sm:$0xff]
  %v151 = vpack.c.bf16 %v46, %v39
  %v152 = vpack.c.bf16 %v47, %v40
  %v153 = vpack.c.bf16 %v48, %v41
  %v154 = vpack.c.bf16 %v49, %v42
  %v155 = vpack.c.bf16 %v50, %v43
  %v156 = vpack.c.bf16 %v51, %v44
  %v157 = vpack.c.bf16 %v52, %v45
  %v158 = vpack.c.bf16 %v60, %v53
  %v159 = vpack.c.bf16 %v61, %v54
  %v160 = vpack.c.bf16 %v62, %v55
  %v161 = vpack.c.bf16 %v63, %v56
  %v162 = vpack.c.bf16 %v64, %v57
  %v163 = vpack.c.bf16 %v65, %v58
  %v164 = vpack.c.bf16 %v66, %v59
  %v165 = vpack.c.bf16 %v74, %v67
  %v166 = vpack.c.bf16 %v75, %v68
  %v167 = vpack.c.bf16 %v76, %v69
  %v168 = vpack.c.bf16 %v77, %v70
  %v169 = vpack.c.bf16 %v78, %v71
  %v170 = vpack.c.bf16 %v79, %v72
  %v171 = vpack.c.bf16 %v80, %v73
  %v172 = vpack.c.bf16 %v88, %v81
  %v173 = vpack.c.bf16 %v89, %v82
  %v174 = vpack.c.bf16 %v90, %v83
  %v175 = vpack.c.bf16 %v91, %v84
  %v176 = vpack.c.bf16 %v92, %v85
  %v177 = vpack.c.bf16 %v93, %v86
  %v178 = vpack.c.bf16 %v94, %v87
  %v179 = vpack.c.bf16 %v102, %v95
  %v180 = vpack.c.bf16 %v103, %v96
  %v181 = vpack.c.bf16 %v104, %v97
  %v182 = vpack.c.bf16 %v105, %v98
  %v183 = vpack.c.bf16 %v106, %v99
  %v184 = vpack.c.bf16 %v107, %v100
  %v185 = vpack.c.bf16 %v108, %v101
  %v186 = vpack.c.bf16 %v116, %v109
  %v187 = vpack.c.bf16 %v117, %v110
  %v188 = vpack.c.bf16 %v118, %v111
  %v189 = vpack.c.bf16 %v119, %v112
  %v190 = vpack.c.bf16 %v120, %v113
  %v191 = vpack.c.bf16 %v121, %v114
  %v192 = vpack.c.bf16 %v122, %v115
  %v193 = vpack.c.bf16 %v130, %v123
  %v194 = vpack.c.bf16 %v131, %v124
  %v195 = vpack.c.bf16 %v132, %v125
  %v196 = vpack.c.bf16 %v133, %v126
  %v197 = vpack.c.bf16 %v134, %v127
  %v198 = vpack.c.bf16 %v135, %v128
  %v199 = vpack.c.bf16 %v136, %v129
  %v200 = vpack.c.bf16 %v144, %v137
  %v201 = vpack.c.bf16 %v145, %v138
  %v202 = vpack.c.bf16 %v146, %v139
  %v203 = vpack.c.bf16 %v147, %v140
  %v204 = vpack.c.bf16 %v148, %v141
  %v205 = vpack.c.bf16 %v149, %v142
  %v206 = vpack.c.bf16 %v150, %v143
  %v207 = vld [vmem:[%s1] sm:$0xff]
  %v208 = vld [vmem:[%s1 + $0x8] sm:$0xff]
  %v209 = vld [vmem:[%s1 + $0x10] sm:$0xff]
  %v210 = vld [vmem:[%s1 + $0x18] sm:$0xff]
  %v211 = vld [vmem:[%s1 + $0x20] sm:$0xff]
  %v212 = vld [vmem:[%s1 + $0x28] sm:$0xff]
  %v213 = vld [vmem:[%s1 + $0x30] sm:$0xff]
  %v214 = vld [vmem:[%s1 + $0x38] sm:$0xff]
  %v215 = vld [vmem:[%s1 + $0x40] sm:$0xff]
  %v216 = vld [vmem:[%s1 + $0x48] sm:$0xff]
  %v217 = vld [vmem:[%s1 + $0x50] sm:$0xff]
  %v218 = vld [vmem:[%s1 + $0x58] sm:$0xff]
  %v219 = vld [vmem:[%s1 + $0x60] sm:$0xff]
  %v220 = vld [vmem:[%s1 + $0x68] sm:$0xff]
  %v221 = vld [vmem:[%s1 + $0x70] sm:$0xff]
  %v222 = vld [vmem:[%s1 + $0x78] sm:$0xff]
  %v223 = vld [vmem:[%s1 + $0x80] sm:$0xff]
  %v224 = vld [vmem:[%s1 + $0x88] sm:$0xff]
  %v225 = vld [vmem:[%s1 + $0x90] sm:$0xff]
  %v226 = vld [vmem:[%s1 + $0x98] sm:$0xff]
  %v227 = vld [vmem:[%s1 + $0xa0] sm:$0xff]
  %v228 = vld [vmem:[%s1 + $0xa8] sm:$0xff]
  %v229 = vld [vmem:[%s1 + $0xb0] sm:$0xff]
  %v230 = vld [vmem:[%s1 + $0xb8] sm:$0xff]
  %v231 = vld [vmem:[%s1 + $0xc0] sm:$0xff]
  %v232 = vld [vmem:[%s1 + $0xc8] sm:$0xff]
  %v233 = vld [vmem:[%s1 + $0xd0] sm:$0xff]
  %v234 = vld [vmem:[%s1 + $0xd8] sm:$0xff]
  %v235 = vld [vmem:[%s1 + $0xe0] sm:$0xff]
  %v236 = vld [vmem:[%s1 + $0xe8] sm:$0xff]
  %v237 = vld [vmem:[%s1 + $0xf0] sm:$0xff]
  %v238 = vld [vmem:[%s1 + $0xf8] sm:$0xff]
  %v239 = vld [vmem:[%s1 + $0x100] sm:$0xff]
  %v240 = vld [vmem:[%s1 + $0x108] sm:$0xff]
  %v241 = vld [vmem:[%s1 + $0x110] sm:$0xff]
  %v242 = vld [vmem:[%s1 + $0x118] sm:$0xff]
  %v243 = vld [vmem:[%s1 + $0x120] sm:$0xff]
  %v244 = vld [vmem:[%s1 + $0x128] sm:$0xff]
  %v245 = vld [vmem:[%s1 + $0x130] sm:$0xff]
  %v246 = vld [vmem:[%s1 + $0x138] sm:$0xff]
  %v247 = vld [vmem:[%s1 + $0x140] sm:$0xff]
  %v248 = vld [vmem:[%s1 + $0x148] sm:$0xff]
  %v249 = vld [vmem:[%s1 + $0x150] sm:$0xff]
  %v250 = vld [vmem:[%s1 + $0x158] sm:$0xff]
  %v251 = vld [vmem:[%s1 + $0x160] sm:$0xff]
  %v252 = vld [vmem:[%s1 + $0x168] sm:$0xff]
  %v253 = vld [vmem:[%s1 + $0x170] sm:$0xff]
  %v254 = vld [vmem:[%s1 + $0x178] sm:$0xff]
  %v255 = vld [vmem:[%s1 + $0x180] sm:$0xff]
  %v256 = vld [vmem:[%s1 + $0x188] sm:$0xff]
  %v257 = vld [vmem:[%s1 + $0x190] sm:$0xff]
  %v258 = vld [vmem:[%s1 + $0x198] sm:$0xff]
  %v259 = vld [vmem:[%s1 + $0x1a0] sm:$0xff]
  %v260 = vld [vmem:[%s1 + $0x1a8] sm:$0xff]
  %v261 = vld [vmem:[%s1 + $0x1b0] sm:$0xff]
  %v262 = vld [vmem:[%s1 + $0x1b8] sm:$0xff]
  %v263 = vld [vmem:[%s1 + $0x1c0] sm:$0xff]
  %v264 = vld [vmem:[%s1 + $0x1c8] sm:$0xff]
  %v265 = vld [vmem:[%s1 + $0x1d0] sm:$0xff]
  %v266 = vld [vmem:[%s1 + $0x1d8] sm:$0xff]
  %v267 = vld [vmem:[%s1 + $0x1e0] sm:$0xff]
  %v268 = vld [vmem:[%s1 + $0x1e8] sm:$0xff]
  %v269 = vld [vmem:[%s1 + $0x1f0] sm:$0xff]
  %v270 = vld [vmem:[%s1 + $0x1f8] sm:$0xff]
  %v271 = vld [vmem:[%s1 + $0x200] sm:$0xff]
  %v272 = vld [vmem:[%s1 + $0x208] sm:$0xff]
  %v273 = vld [vmem:[%s1 + $0x210] sm:$0xff]
  %v274 = vld [vmem:[%s1 + $0x218] sm:$0xff]
  %v275 = vld [vmem:[%s1 + $0x220] sm:$0xff]
  %v276 = vld [vmem:[%s1 + $0x228] sm:$0xff]
  %v277 = vld [vmem:[%s1 + $0x230] sm:$0xff]
  %v278 = vld [vmem:[%s1 + $0x238] sm:$0xff]
  %v279 = vld [vmem:[%s1 + $0x240] sm:$0xff]
  %v280 = vld [vmem:[%s1 + $0x248] sm:$0xff]
  %v281 = vld [vmem:[%s1 + $0x250] sm:$0xff]
  %v282 = vld [vmem:[%s1 + $0x258] sm:$0xff]
  %v283 = vld [vmem:[%s1 + $0x260] sm:$0xff]
  %v284 = vld [vmem:[%s1 + $0x268] sm:$0xff]
  %v285 = vld [vmem:[%s1 + $0x270] sm:$0xff]
  %v286 = vld [vmem:[%s1 + $0x278] sm:$0xff]
  %v287 = vld [vmem:[%s1 + $0x280] sm:$0xff]
  %v288 = vld [vmem:[%s1 + $0x288] sm:$0xff]
  %v289 = vld [vmem:[%s1 + $0x290] sm:$0xff]
  %v290 = vld [vmem:[%s1 + $0x298] sm:$0xff]
  %v291 = vld [vmem:[%s1 + $0x2a0] sm:$0xff]
  %v292 = vld [vmem:[%s1 + $0x2a8] sm:$0xff]
  %v293 = vld [vmem:[%s1 + $0x2b0] sm:$0xff]
  %v294 = vld [vmem:[%s1 + $0x2b8] sm:$0xff]
  %v295 = vld [vmem:[%s1 + $0x2c0] sm:$0xff]
  %v296 = vld [vmem:[%s1 + $0x2c8] sm:$0xff]
  %v297 = vld [vmem:[%s1 + $0x2d0] sm:$0xff]
  %v298 = vld [vmem:[%s1 + $0x2d8] sm:$0xff]
  %v299 = vld [vmem:[%s1 + $0x2e0] sm:$0xff]
  %v300 = vld [vmem:[%s1 + $0x2e8] sm:$0xff]
  %v301 = vld [vmem:[%s1 + $0x2f0] sm:$0xff]
  %v302 = vld [vmem:[%s1 + $0x2f8] sm:$0xff]
  %v303 = vld [vmem:[%s1 + $0x300] sm:$0xff]
  %v304 = vld [vmem:[%s1 + $0x308] sm:$0xff]
  %v305 = vld [vmem:[%s2] sm:$0x3]
  %v307 = vlaneseq
  %v308 = vshrl.u32 %v307, 7
  %v309 = vsub.s32 0, %v308
  %v310 = vrot.slane %v305, %v309
  %v311 = vlaneseq
  %v312 = vshrl.u32 %v311, 7
  %v313 = vsub.s32 1, %v312
  %v314 = vrot.slane %v305, %v313
  %v415 = vunpack.c.l.b16 %v207
  %v416 = vunpack.c.h.b16 %v207
  %v417 = vunpack.c.l.b16 %v208
  %v418 = vunpack.c.h.b16 %v208
  %v419 = vunpack.c.l.b16 %v209
  %v420 = vunpack.c.h.b16 %v209
  %v421 = vunpack.c.l.b16 %v210
  %v422 = vunpack.c.h.b16 %v210
  %v423 = vunpack.c.l.b16 %v211
  %v424 = vunpack.c.h.b16 %v211
  %v425 = vunpack.c.l.b16 %v212
  %v426 = vunpack.c.h.b16 %v212
  %v427 = vunpack.c.l.b16 %v213
  %v428 = vunpack.c.h.b16 %v213
  %v429 = vunpack.c.l.b16 %v214
  %v430 = vunpack.c.h.b16 %v214
  %v431 = vunpack.c.l.b16 %v215
  %v432 = vunpack.c.h.b16 %v215
  %v433 = vunpack.c.l.b16 %v216
  %v434 = vunpack.c.h.b16 %v216
  %v435 = vunpack.c.l.b16 %v217
  %v436 = vunpack.c.h.b16 %v217
  %v437 = vunpack.c.l.b16 %v218
  %v438 = vunpack.c.h.b16 %v218
  %v439 = vunpack.c.l.b16 %v219
  %v440 = vunpack.c.h.b16 %v219
  %v441 = vunpack.c.l.b16 %v220
  %v442 = vunpack.c.h.b16 %v220
  %v443 = vunpack.c.l.b16 %v221
  %v444 = vunpack.c.h.b16 %v221
  %v445 = vunpack.c.l.b16 %v222
  %v446 = vunpack.c.h.b16 %v222
  %v447 = vunpack.c.l.b16 %v223
  %v448 = vunpack.c.h.b16 %v223
  %v449 = vunpack.c.l.b16 %v224
  %v450 = vunpack.c.h.b16 %v224
  %v451 = vunpack.c.l.b16 %v225
  %v452 = vunpack.c.h.b16 %v225
  %v453 = vunpack.c.l.b16 %v226
  %v454 = vunpack.c.h.b16 %v226
  %v455 = vunpack.c.l.b16 %v227
  %v456 = vunpack.c.h.b16 %v227
  %v457 = vunpack.c.l.b16 %v228
  %v458 = vunpack.c.h.b16 %v228
  %v459 = vunpack.c.l.b16 %v229
  %v460 = vunpack.c.h.b16 %v229
  %v461 = vunpack.c.l.b16 %v230
  %v462 = vunpack.c.h.b16 %v230
  %v463 = vunpack.c.l.b16 %v231
  %v464 = vunpack.c.h.b16 %v231
  %v465 = vunpack.c.l.b16 %v232
  %v466 = vunpack.c.h.b16 %v232
  %v467 = vunpack.c.l.b16 %v233
  %v468 = vunpack.c.h.b16 %v233
  %v469 = vunpack.c.l.b16 %v234
  %v470 = vunpack.c.h.b16 %v234
  %v471 = vunpack.c.l.b16 %v235
  %v472 = vunpack.c.h.b16 %v235
  %v473 = vunpack.c.l.b16 %v236
  %v474 = vunpack.c.h.b16 %v236
  %v475 = vunpack.c.l.b16 %v237
  %v476 = vunpack.c.h.b16 %v237
  %v477 = vunpack.c.l.b16 %v238
  %v478 = vunpack.c.h.b16 %v238
  %v479 = vunpack.c.l.b16 %v239
  %v480 = vunpack.c.h.b16 %v239
  %v481 = vunpack.c.l.b16 %v240
  %v482 = vunpack.c.h.b16 %v240
  %v483 = vunpack.c.l.b16 %v241
  %v484 = vunpack.c.h.b16 %v241
  %v485 = vunpack.c.l.b16 %v242
  %v486 = vunpack.c.h.b16 %v242
  %v487 = vunpack.c.l.b16 %v243
  %v488 = vunpack.c.h.b16 %v243
  %v489 = vunpack.c.l.b16 %v244
  %v490 = vunpack.c.h.b16 %v244
  %v491 = vunpack.c.l.b16 %v245
  %v492 = vunpack.c.h.b16 %v245
  %v493 = vunpack.c.l.b16 %v246
  %v494 = vunpack.c.h.b16 %v246
  %v495 = vunpack.c.l.b16 %v247
  %v496 = vunpack.c.h.b16 %v247
  %v497 = vunpack.c.l.b16 %v248
  %v498 = vunpack.c.h.b16 %v248
  %v499 = vunpack.c.l.b16 %v249
  %v500 = vunpack.c.h.b16 %v249
  %v501 = vunpack.c.l.b16 %v250
  %v502 = vunpack.c.h.b16 %v250
  %v503 = vunpack.c.l.b16 %v251
  %v504 = vunpack.c.h.b16 %v251
  %v505 = vunpack.c.l.b16 %v252
  %v506 = vunpack.c.h.b16 %v252
  %v507 = vunpack.c.l.b16 %v253
  %v508 = vunpack.c.h.b16 %v253
  %v509 = vunpack.c.l.b16 %v254
  %v510 = vunpack.c.h.b16 %v254
  %v511 = vunpack.c.l.b16 %v255
  %v512 = vunpack.c.h.b16 %v255
  %v513 = vunpack.c.l.b16 %v256
  %v514 = vunpack.c.h.b16 %v256
  %v515 = vunpack.c.l.b16 %v257
  %v516 = vunpack.c.h.b16 %v257
  %v517 = vunpack.c.l.b16 %v258
  %v518 = vunpack.c.h.b16 %v258
  %v519 = vunpack.c.l.b16 %v259
  %v520 = vunpack.c.h.b16 %v259
  %v521 = vunpack.c.l.b16 %v260
  %v522 = vunpack.c.h.b16 %v260
  %v523 = vunpack.c.l.b16 %v261
  %v524 = vunpack.c.h.b16 %v261
  %v525 = vunpack.c.l.b16 %v262
  %v526 = vunpack.c.h.b16 %v262
  %v527 = vunpack.c.l.b16 %v263
  %v528 = vunpack.c.h.b16 %v263
  %v529 = vunpack.c.l.b16 %v264
  %v530 = vunpack.c.h.b16 %v264
  %v531 = vunpack.c.l.b16 %v265
  %v532 = vunpack.c.h.b16 %v265
  %v533 = vunpack.c.l.b16 %v266
  %v534 = vunpack.c.h.b16 %v266
  %v535 = vunpack.c.l.b16 %v267
  %v536 = vunpack.c.h.b16 %v267
  %v537 = vunpack.c.l.b16 %v268
  %v538 = vunpack.c.h.b16 %v268
  %v539 = vunpack.c.l.b16 %v269
  %v540 = vunpack.c.h.b16 %v269
  %v541 = vunpack.c.l.b16 %v270
  %v542 = vunpack.c.h.b16 %v270
  %v543 = vunpack.c.l.b16 %v271
  %v544 = vunpack.c.h.b16 %v271
  %v545 = vunpack.c.l.b16 %v272
  %v546 = vunpack.c.h.b16 %v272
  %v547 = vunpack.c.l.b16 %v273
  %v548 = vunpack.c.h.b16 %v273
  %v549 = vunpack.c.l.b16 %v274
  %v550 = vunpack.c.h.b16 %v274
  %v551 = vunpack.c.l.b16 %v275
  %v552 = vunpack.c.h.b16 %v275
  %v553 = vunpack.c.l.b16 %v276
  %v554 = vunpack.c.h.b16 %v276
  %v555 = vunpack.c.l.b16 %v277
  %v556 = vunpack.c.h.b16 %v277
  %v557 = vunpack.c.l.b16 %v278
  %v558 = vunpack.c.h.b16 %v278
  %v559 = vunpack.c.l.b16 %v279
  %v560 = vunpack.c.h.b16 %v279
  %v561 = vunpack.c.l.b16 %v280
  %v562 = vunpack.c.h.b16 %v280
  %v563 = vunpack.c.l.b16 %v281
  %v564 = vunpack.c.h.b16 %v281
  %v565 = vunpack.c.l.b16 %v282
  %v566 = vunpack.c.h.b16 %v282
  %v567 = vunpack.c.l.b16 %v283
  %v568 = vunpack.c.h.b16 %v283
  %v569 = vunpack.c.l.b16 %v284
  %v570 = vunpack.c.h.b16 %v284
  %v571 = vunpack.c.l.b16 %v285
  %v572 = vunpack.c.h.b16 %v285
  %v573 = vunpack.c.l.b16 %v286
  %v574 = vunpack.c.h.b16 %v286
  %v575 = vunpack.c.l.b16 %v287
  %v576 = vunpack.c.h.b16 %v287
  %v577 = vunpack.c.l.b16 %v288
  %v578 = vunpack.c.h.b16 %v288
  %v579 = vunpack.c.l.b16 %v289
  %v580 = vunpack.c.h.b16 %v289
  %v581 = vunpack.c.l.b16 %v290
  %v582 = vunpack.c.h.b16 %v290
  %v583 = vunpack.c.l.b16 %v291
  %v584 = vunpack.c.h.b16 %v291
  %v585 = vunpack.c.l.b16 %v292
  %v586 = vunpack.c.h.b16 %v292
  %v587 = vunpack.c.l.b16 %v293
  %v588 = vunpack.c.h.b16 %v293
  %v589 = vunpack.c.l.b16 %v294
  %v590 = vunpack.c.h.b16 %v294
  %v591 = vunpack.c.l.b16 %v295
  %v592 = vunpack.c.h.b16 %v295
  %v593 = vunpack.c.l.b16 %v296
  %v594 = vunpack.c.h.b16 %v296
  %v595 = vunpack.c.l.b16 %v297
  %v596 = vunpack.c.h.b16 %v297
  %v597 = vunpack.c.l.b16 %v298
  %v598 = vunpack.c.h.b16 %v298
  %v599 = vunpack.c.l.b16 %v299
  %v600 = vunpack.c.h.b16 %v299
  %v601 = vunpack.c.l.b16 %v300
  %v602 = vunpack.c.h.b16 %v300
  %v603 = vunpack.c.l.b16 %v301
  %v604 = vunpack.c.h.b16 %v301
  %v605 = vunpack.c.l.b16 %v302
  %v606 = vunpack.c.h.b16 %v302
  %v607 = vunpack.c.l.b16 %v303
  %v608 = vunpack.c.h.b16 %v303
  %v609 = vunpack.c.l.b16 %v304
  %v610 = vunpack.c.h.b16 %v304
  %v611 = vpack.c.b16 %v417, %v415
  %v612 = vpack.c.b16 %v418, %v416
  %v613 = vpack.c.b16 %v421, %v419
  %v614 = vpack.c.b16 %v422, %v420
  %v615 = vpack.c.b16 %v425, %v423
  %v616 = vpack.c.b16 %v426, %v424
  %v617 = vpack.c.b16 %v429, %v427
  %v618 = vpack.c.b16 %v430, %v428
  %v619 = vpack.c.b16 %v433, %v431
  %v620 = vpack.c.b16 %v434, %v432
  %v621 = vpack.c.b16 %v437, %v435
  %v622 = vpack.c.b16 %v438, %v436
  %v623 = vpack.c.b16 %v441, %v439
  %v624 = vpack.c.b16 %v442, %v440
  %v625 = vpack.c.b16 %v445, %v443
  %v626 = vpack.c.b16 %v446, %v444
  %v627 = vpack.c.b16 %v449, %v447
  %v628 = vpack.c.b16 %v450, %v448
  %v629 = vpack.c.b16 %v453, %v451
  %v630 = vpack.c.b16 %v454, %v452
  %v631 = vpack.c.b16 %v457, %v455
  %v632 = vpack.c.b16 %v458, %v456
  %v633 = vpack.c.b16 %v461, %v459
  %v634 = vpack.c.b16 %v462, %v460
  %v635 = vpack.c.b16 %v465, %v463
  %v636 = vpack.c.b16 %v466, %v464
  %v637 = vpack.c.b16 %v469, %v467
  %v638 = vpack.c.b16 %v470, %v468
  %v639 = vpack.c.b16 %v473, %v471
  %v640 = vpack.c.b16 %v474, %v472
  %v641 = vpack.c.b16 %v477, %v475
  %v642 = vpack.c.b16 %v478, %v476
  %v643 = vpack.c.b16 %v481, %v479
  %v644 = vpack.c.b16 %v482, %v480
  %v645 = vpack.c.b16 %v485, %v483
  %v646 = vpack.c.b16 %v486, %v484
  %v647 = vpack.c.b16 %v489, %v487
  %v648 = vpack.c.b16 %v490, %v488
  %v649 = vpack.c.b16 %v493, %v491
  %v650 = vpack.c.b16 %v494, %v492
  %v651 = vpack.c.b16 %v497, %v495
  %v652 = vpack.c.b16 %v498, %v496
  %v653 = vpack.c.b16 %v501, %v499
  %v654 = vpack.c.b16 %v502, %v500
  %v655 = vpack.c.b16 %v505, %v503
  %v656 = vpack.c.b16 %v506, %v504
  %v657 = vpack.c.b16 %v509, %v507
  %v658 = vpack.c.b16 %v510, %v508
  %v659 = vpack.c.b16 %v513, %v511
  %v660 = vpack.c.b16 %v514, %v512
  %v661 = vpack.c.b16 %v517, %v515
  %v662 = vpack.c.b16 %v518, %v516
  %v663 = vpack.c.b16 %v521, %v519
  %v664 = vpack.c.b16 %v522, %v520
  %v665 = vpack.c.b16 %v525, %v523
  %v666 = vpack.c.b16 %v526, %v524
  %v667 = vpack.c.b16 %v529, %v527
  %v668 = vpack.c.b16 %v530, %v528
  %v669 = vpack.c.b16 %v533, %v531
  %v670 = vpack.c.b16 %v534, %v532
  %v671 = vpack.c.b16 %v537, %v535
  %v672 = vpack.c.b16 %v538, %v536
  %v673 = vpack.c.b16 %v541, %v539
  %v674 = vpack.c.b16 %v542, %v540
  %v675 = vpack.c.b16 %v545, %v543
  %v676 = vpack.c.b16 %v546, %v544
  %v677 = vpack.c.b16 %v549, %v547
  %v678 = vpack.c.b16 %v550, %v548
  %v679 = vpack.c.b16 %v553, %v551
  %v680 = vpack.c.b16 %v554, %v552
  %v681 = vpack.c.b16 %v557, %v555
  %v682 = vpack.c.b16 %v558, %v556
  %v683 = vpack.c.b16 %v561, %v559
  %v684 = vpack.c.b16 %v562, %v560
  %v685 = vpack.c.b16 %v565, %v563
  %v686 = vpack.c.b16 %v566, %v564
  %v687 = vpack.c.b16 %v569, %v567
  %v688 = vpack.c.b16 %v570, %v568
  %v689 = vpack.c.b16 %v573, %v571
  %v690 = vpack.c.b16 %v574, %v572
  %v691 = vpack.c.b16 %v577, %v575
  %v692 = vpack.c.b16 %v578, %v576
  %v693 = vpack.c.b16 %v581, %v579
  %v694 = vpack.c.b16 %v582, %v580
  %v695 = vpack.c.b16 %v585, %v583
  %v696 = vpack.c.b16 %v586, %v584
  %v697 = vpack.c.b16 %v589, %v587
  %v698 = vpack.c.b16 %v590, %v588
  %v699 = vpack.c.b16 %v593, %v591
  %v700 = vpack.c.b16 %v594, %v592
  %v701 = vpack.c.b16 %v597, %v595
  %v702 = vpack.c.b16 %v598, %v596
  %v703 = vpack.c.b16 %v601, %v599
  %v704 = vpack.c.b16 %v602, %v600
  %v705 = vpack.c.b16 %v605, %v603
  %v706 = vpack.c.b16 %v606, %v604
  %v707 = vpack.c.b16 %v609, %v607
  %v708 = vpack.c.b16 %v610, %v608
  %vm807 = vcmask 130048
  %v809 = vsel %vm807, %v157, 0
  %v812 = vsel %vm807, %v164, 0
  %v815 = vsel %vm807, %v171, 0
  %v818 = vsel %vm807, %v178, 0
  %v821 = vsel %vm807, %v185, 0
  %v824 = vsel %vm807, %v192, 0
  %v827 = vsel %vm807, %v199, 0
  %v830 = vsel %vm807, %v206, 0
  %832 = vmatprep.subr.bf16.mxu0 %v612
  %833 = vmatpush1.bf16.msra.mxu0 %v611
  %834 = vmatprep.subr.bf16.mxu0 %v614
  %835 = vmatpush1.bf16.msra.mxu0 %v613
  %836 = vmatprep.subr.bf16.mxu0 %v616
  %837 = vmatpush1.bf16.msra.mxu0 %v615
  %838 = vmatprep.subr.bf16.mxu0 %v618
  %839 = vmatpush1.bf16.msra.mxu0 %v617
  %840 = vmatprep.subr.bf16.mxu0 %v620
  %841 = vmatpush1.bf16.msra.mxu0 %v619
  %842 = vmatprep.subr.bf16.mxu0 %v622
  %843 = vmatpush1.bf16.msra.mxu0 %v621
  %844 = vmatprep.subr.bf16.mxu0 %v624
  %845 = vmatpush1.bf16.msra.mxu0 %v623
  %846 = vmatprep.subr.bf16.mxu0 %v626
  %847 = vmatpush1.bf16.msra.mxu0 %v625
  %848 = vmatprep.subr.bf16.mxu0 %v628
  %849 = vmatpush1.bf16.msra.mxu0 %v627
  %850 = vmatprep.subr.bf16.mxu0 %v630
  %851 = vmatpush1.bf16.msra.mxu0 %v629
  %852 = vmatprep.subr.bf16.mxu0 %v632
  %853 = vmatpush1.bf16.msra.mxu0 %v631
  %854 = vmatprep.subr.bf16.mxu0 %v634
  %855 = vmatpush1.bf16.msra.mxu0 %v633
  %856 = vmatprep.subr.bf16.mxu0 %v636
  %857 = vmatpush1.bf16.msra.mxu0 %v635
  %858 = vmatprep.subr.bf16.mxu0 %v638
  %859 = vmatpush1.bf16.msra.mxu0 %v637
  %860 = vmatprep.subr.bf16.mxu0 %v640
  %861 = vmatpush1.bf16.msra.mxu0 %v639
  %862 = vmatprep.subr.bf16.mxu0 %v642
  %863 = vmatpush1.bf16.msra.mxu0 %v641
  %864 = vmatprep.mubr.bf16.mxu0 %v152
  %865 = vmatmul.mubr.bf16.gmra.mrb[0].mxu0 %v151
  %v866 = vpop.f32.mrb[0].mxu0
  %v867 = vadd.f32 %v310, %v866
  %v868 = vpop.f32.mrb[0].mxu0
  %v869 = vadd.f32 %v314, %v868
  %v870 = vpop.f32.mrb[0].mxu0
  %v871 = vadd.f32 %v310, %v870
  %v872 = vpop.f32.mrb[0].mxu0
  %v873 = vadd.f32 %v314, %v872
  %874 = vmatprep.mubr.bf16.mxu0 %v159
  %875 = vmatmul.mubr.bf16.gmra.mrb[0].mxu0 %v158
  %v876 = vpop.f32.mrb[0].mxu0
  %v877 = vadd.f32 %v310, %v876
  %v878 = vpop.f32.mrb[0].mxu0
  %v879 = vadd.f32 %v314, %v878
  %v880 = vpop.f32.mrb[0].mxu0
  %v881 = vadd.f32 %v310, %v880
  %v882 = vpop.f32.mrb[0].mxu0
  %v883 = vadd.f32 %v314, %v882
  %884 = vmatprep.mubr.bf16.mxu0 %v166
  %885 = vmatmul.mubr.bf16.gmra.mrb[0].mxu0 %v165
  %v886 = vpop.f32.mrb[0].mxu0
  %v887 = vadd.f32 %v310, %v886
  %v888 = vpop.f32.mrb[0].mxu0
  %v889 = vadd.f32 %v314, %v888
  %v890 = vpop.f32.mrb[0].mxu0
  %v891 = vadd.f32 %v310, %v890
  %v892 = vpop.f32.mrb[0].mxu0
  %v893 = vadd.f32 %v314, %v892
  %894 = vmatprep.mubr.bf16.mxu0 %v173
  %895 = vmatmul.mubr.bf16.gmra.mrb[0].mxu0 %v172
  %v896 = vpop.f32.mrb[0].mxu0
  %v897 = vadd.f32 %v310, %v896
  %v898 = vpop.f32.mrb[0].mxu0
  %v899 = vadd.f32 %v314, %v898
  %v900 = vpop.f32.mrb[0].mxu0
  %v901 = vadd.f32 %v310, %v900
  %v902 = vpop.f32.mrb[0].mxu0
  %v903 = vadd.f32 %v314, %v902
  %904 = vmatprep.mubr.bf16.mxu0 %v180
  %905 = vmatmul.mubr.bf16.gmra.mrb[0].mxu0 %v179
  %v906 = vpop.f32.mrb[0].mxu0
  %v907 = vadd.f32 %v310, %v906
  %v908 = vpop.f32.mrb[0].mxu0
  %v909 = vadd.f32 %v314, %v908
  %v910 = vpop.f32.mrb[0].mxu0
  %v911 = vadd.f32 %v310, %v910
  %v912 = vpop.f32.mrb[0].mxu0
  %v913 = vadd.f32 %v314, %v912
  %914 = vmatprep.mubr.bf16.mxu0 %v187
  %915 = vmatmul.mubr.bf16.gmra.mrb[0].mxu0 %v186
  %v916 = vpop.f32.mrb[0].mxu0
  %v917 = vadd.f32 %v310, %v916
  %v918 = vpop.f32.mrb[0].mxu0
  %v919 = vadd.f32 %v314, %v918
  %v920 = vpop.f32.mrb[0].mxu0
  %v921 = vadd.f32 %v310, %v920
  %v922 = vpop.f32.mrb[0].mxu0
  %v923 = vadd.f32 %v314, %v922
  %924 = vmatprep.mubr.bf16.mxu0 %v194
  %925 = vmatmul.mubr.bf16.gmra.mrb[0].mxu0 %v193
  %v926 = vpop.f32.mrb[0].mxu0
  %v927 = vadd.f32 %v310, %v926
  %v928 = vpop.f32.mrb[0].mxu0
  %v929 = vadd.f32 %v314, %v928
  %v930 = vpop.f32.mrb[0].mxu0
  %v931 = vadd.f32 %v310, %v930
  %v932 = vpop.f32.mrb[0].mxu0
  %v933 = vadd.f32 %v314, %v932
  %934 = vmatprep.mubr.bf16.mxu0 %v201
  %935 = vmatmul.mubr.bf16.gmra.mrb[0].mxu0 %v200
  %v936 = vpop.f32.mrb[0].mxu0
  %v937 = vadd.f32 %v310, %v936
  %v938 = vpop.f32.mrb[0].mxu0
  %v939 = vadd.f32 %v314, %v938
  %v940 = vpop.f32.mrb[0].mxu0
  %v941 = vadd.f32 %v310, %v940
  %v942 = vpop.f32.mrb[0].mxu0
  %v943 = vadd.f32 %v314, %v942
  %944 = vdwg.mxu0
  %945 = vmatprep.subr.bf16.mxu0 %v644
  %946 = vmatpush1.bf16.msra.mxu0 %v643
  %947 = vmatprep.subr.bf16.mxu0 %v646
  %948 = vmatpush1.bf16.msra.mxu0 %v645
  %949 = vmatprep.subr.bf16.mxu0 %v648
  %950 = vmatpush1.bf16.msra.mxu0 %v647
  %951 = vmatprep.subr.bf16.mxu0 %v650
  %952 = vmatpush1.bf16.msra.mxu0 %v649
  %953 = vmatprep.subr.bf16.mxu0 %v652
  %954 = vmatpush1.bf16.msra.mxu0 %v651
  %955 = vmatprep.subr.bf16.mxu0 %v654
  %956 = vmatpush1.bf16.msra.mxu0 %v653
  %957 = vmatprep.subr.bf16.mxu0 %v656
  %958 = vmatpush1.bf16.msra.mxu0 %v655
  %959 = vmatprep.subr.bf16.mxu0 %v658
  %960 = vmatpush1.bf16.msra.mxu0 %v657
  %961 = vmatprep.subr.bf16.mxu0 %v660
  %962 = vmatpush1.bf16.msra.mxu0 %v659
  %963 = vmatprep.subr.bf16.mxu0 %v662
  %964 = vmatpush1.bf16.msra.mxu0 %v661
  %965 = vmatprep.subr.bf16.mxu0 %v664
  %966 = vmatpush1.bf16.msra.mxu0 %v663
  %967 = vmatprep.subr.bf16.mxu0 %v666
  %968 = vmatpush1.bf16.msra.mxu0 %v665
  %969 = vmatprep.subr.bf16.mxu0 %v668
  %970 = vmatpush1.bf16.msra.mxu0 %v667
  %971 = vmatprep.subr.bf16.mxu0 %v670
  %972 = vmatpush1.bf16.msra.mxu0 %v669
  %973 = vmatprep.subr.bf16.mxu0 %v672
  %974 = vmatpush1.bf16.msra.mxu0 %v671
  %975 = vmatprep.subr.bf16.mxu0 %v674
  %976 = vmatpush1.bf16.msra.mxu0 %v673
  %977 = vmatprep.mubr.bf16.mxu0 %v154
  %978 = vmatmul.mubr.bf16.gmra.mrb[0].mxu0 %v153
  %v979 = vpop.f32.mrb[0].mxu0
  %v980 = vadd.f32 %v867, %v979
  %v981 = vpop.f32.mrb[0].mxu0
  %v982 = vadd.f32 %v869, %v981
  %v983 = vpop.f32.mrb[0].mxu0
  %v984 = vadd.f32 %v871, %v983
  %v985 = vpop.f32.mrb[0].mxu0
  %v986 = vadd.f32 %v873, %v985
  %987 = vmatprep.mubr.bf16.mxu0 %v161
  %988 = vmatmul.mubr.bf16.gmra.mrb[0].mxu0 %v160
  %v989 = vpop.f32.mrb[0].mxu0
  %v990 = vadd.f32 %v877, %v989
  %v991 = vpop.f32.mrb[0].mxu0
  %v992 = vadd.f32 %v879, %v991
  %v993 = vpop.f32.mrb[0].mxu0
  %v994 = vadd.f32 %v881, %v993
  %v995 = vpop.f32.mrb[0].mxu0
  %v996 = vadd.f32 %v883, %v995
  %997 = vmatprep.mubr.bf16.mxu0 %v168
  %998 = vmatmul.mubr.bf16.gmra.mrb[0].mxu0 %v167
  %v999 = vpop.f32.mrb[0].mxu0
  %v1000 = vadd.f32 %v887, %v999
  %v1001 = vpop.f32.mrb[0].mxu0
  %v1002 = vadd.f32 %v889, %v1001
  %v1003 = vpop.f32.mrb[0].mxu0
  %v1004 = vadd.f32 %v891, %v1003
  %v1005 = vpop.f32.mrb[0].mxu0
  %v1006 = vadd.f32 %v893, %v1005
  %1007 = vmatprep.mubr.bf16.mxu0 %v175
  %1008 = vmatmul.mubr.bf16.gmra.mrb[0].mxu0 %v174
  %v1009 = vpop.f32.mrb[0].mxu0
  %v1010 = vadd.f32 %v897, %v1009
  %v1011 = vpop.f32.mrb[0].mxu0
  %v1012 = vadd.f32 %v899, %v1011
  %v1013 = vpop.f32.mrb[0].mxu0
  %v1014 = vadd.f32 %v901, %v1013
  %v1015 = vpop.f32.mrb[0].mxu0
  %v1016 = vadd.f32 %v903, %v1015
  %1017 = vmatprep.mubr.bf16.mxu0 %v182
  %1018 = vmatmul.mubr.bf16.gmra.mrb[0].mxu0 %v181
  %v1019 = vpop.f32.mrb[0].mxu0
  %v1020 = vadd.f32 %v907, %v1019
  %v1021 = vpop.f32.mrb[0].mxu0
  %v1022 = vadd.f32 %v909, %v1021
  %v1023 = vpop.f32.mrb[0].mxu0
  %v1024 = vadd.f32 %v911, %v1023
  %v1025 = vpop.f32.mrb[0].mxu0
  %v1026 = vadd.f32 %v913, %v1025
  %1027 = vmatprep.mubr.bf16.mxu0 %v189
  %1028 = vmatmul.mubr.bf16.gmra.mrb[0].mxu0 %v188
  %v1029 = vpop.f32.mrb[0].mxu0
  %v1030 = vadd.f32 %v917, %v1029
  %v1031 = vpop.f32.mrb[0].mxu0
  %v1032 = vadd.f32 %v919, %v1031
  %v1033 = vpop.f32.mrb[0].mxu0
  %v1034 = vadd.f32 %v921, %v1033
  %v1035 = vpop.f32.mrb[0].mxu0
  %v1036 = vadd.f32 %v923, %v1035
  %1037 = vmatprep.mubr.bf16.mxu0 %v196
  %1038 = vmatmul.mubr.bf16.gmra.mrb[0].mxu0 %v195
  %v1039 = vpop.f32.mrb[0].mxu0
  %v1040 = vadd.f32 %v927, %v1039
  %v1041 = vpop.f32.mrb[0].mxu0
  %v1042 = vadd.f32 %v929, %v1041
  %v1043 = vpop.f32.mrb[0].mxu0
  %v1044 = vadd.f32 %v931, %v1043
  %v1045 = vpop.f32.mrb[0].mxu0
  %v1046 = vadd.f32 %v933, %v1045
  %1047 = vmatprep.mubr.bf16.mxu0 %v203
  %1048 = vmatmul.mubr.bf16.gmra.mrb[0].mxu0 %v202
  %v1049 = vpop.f32.mrb[0].mxu0
  %v1050 = vadd.f32 %v937, %v1049
  %v1051 = vpop.f32.mrb[0].mxu0
  %v1052 = vadd.f32 %v939, %v1051
  %v1053 = vpop.f32.mrb[0].mxu0
  %v1054 = vadd.f32 %v941, %v1053
  %v1055 = vpop.f32.mrb[0].mxu0
  %v1056 = vadd.f32 %v943, %v1055
  %1057 = vdwg.mxu0
  %1058 = vmatprep.subr.bf16.mxu0 %v676
  %1059 = vmatpush1.bf16.msra.mxu0 %v675
  %1060 = vmatprep.subr.bf16.mxu0 %v678
  %1061 = vmatpush1.bf16.msra.mxu0 %v677
  %1062 = vmatprep.subr.bf16.mxu0 %v680
  %1063 = vmatpush1.bf16.msra.mxu0 %v679
  %1064 = vmatprep.subr.bf16.mxu0 %v682
  %1065 = vmatpush1.bf16.msra.mxu0 %v681
  %1066 = vmatprep.subr.bf16.mxu0 %v684
  %1067 = vmatpush1.bf16.msra.mxu0 %v683
  %1068 = vmatprep.subr.bf16.mxu0 %v686
  %1069 = vmatpush1.bf16.msra.mxu0 %v685
  %1070 = vmatprep.subr.bf16.mxu0 %v688
  %1071 = vmatpush1.bf16.msra.mxu0 %v687
  %1072 = vmatprep.subr.bf16.mxu0 %v690
  %1073 = vmatpush1.bf16.msra.mxu0 %v689
  %1074 = vmatprep.subr.bf16.mxu0 %v692
  %1075 = vmatpush1.bf16.msra.mxu0 %v691
  %1076 = vmatprep.subr.bf16.mxu0 %v694
  %1077 = vmatpush1.bf16.msra.mxu0 %v693
  %1078 = vmatprep.subr.bf16.mxu0 %v696
  %1079 = vmatpush1.bf16.msra.mxu0 %v695
  %1080 = vmatprep.subr.bf16.mxu0 %v698
  %1081 = vmatpush1.bf16.msra.mxu0 %v697
  %1082 = vmatprep.subr.bf16.mxu0 %v700
  %1083 = vmatpush1.bf16.msra.mxu0 %v699
  %1084 = vmatprep.subr.bf16.mxu0 %v702
  %1085 = vmatpush1.bf16.msra.mxu0 %v701
  %1086 = vmatprep.subr.bf16.mxu0 %v704
  %1087 = vmatpush1.bf16.msra.mxu0 %v703
  %1088 = vmatprep.subr.bf16.mxu0 %v706
  %1089 = vmatpush1.bf16.msra.mxu0 %v705
  %1090 = vmatprep.mubr.bf16.mxu0 %v156
  %1091 = vmatmul.mubr.bf16.gmra.mrb[0].mxu0 %v155
  %v1092 = vpop.f32.mrb[0].mxu0
  %v1093 = vadd.f32 %v980, %v1092
  %v1094 = vpop.f32.mrb[0].mxu0
  %v1095 = vadd.f32 %v982, %v1094
  %v1096 = vpop.f32.mrb[0].mxu0
  %v1097 = vadd.f32 %v984, %v1096
  %v1098 = vpop.f32.mrb[0].mxu0
  %v1099 = vadd.f32 %v986, %v1098
  %1100 = vmatprep.mubr.bf16.mxu0 %v163
  %1101 = vmatmul.mubr.bf16.gmra.mrb[0].mxu0 %v162
  %v1102 = vpop.f32.mrb[0].mxu0
  %v1103 = vadd.f32 %v990, %v1102
  %v1104 = vpop.f32.mrb[0].mxu0
  %v1105 = vadd.f32 %v992, %v1104
  %v1106 = vpop.f32.mrb[0].mxu0
  %v1107 = vadd.f32 %v994, %v1106
  %v1108 = vpop.f32.mrb[0].mxu0
  %v1109 = vadd.f32 %v996, %v1108
  %1110 = vmatprep.mubr.bf16.mxu0 %v170
  %1111 = vmatmul.mubr.bf16.gmra.mrb[0].mxu0 %v169
  %v1112 = vpop.f32.mrb[0].mxu0
  %v1113 = vadd.f32 %v1000, %v1112
  %v1114 = vpop.f32.mrb[0].mxu0
  %v1115 = vadd.f32 %v1002, %v1114
  %v1116 = vpop.f32.mrb[0].mxu0
  %v1117 = vadd.f32 %v1004, %v1116
  %v1118 = vpop.f32.mrb[0].mxu0
  %v1119 = vadd.f32 %v1006, %v1118
  %1120 = vmatprep.mubr.bf16.mxu0 %v177
  %1121 = vmatmul.mubr.bf16.gmra.mrb[0].mxu0 %v176
  %v1122 = vpop.f32.mrb[0].mxu0
  %v1123 = vadd.f32 %v1010, %v1122
  %v1124 = vpop.f32.mrb[0].mxu0
  %v1125 = vadd.f32 %v1012, %v1124
  %v1126 = vpop.f32.mrb[0].mxu0
  %v1127 = vadd.f32 %v1014, %v1126
  %v1128 = vpop.f32.mrb[0].mxu0
  %v1129 = vadd.f32 %v1016, %v1128
  %1130 = vmatprep.mubr.bf16.mxu0 %v184
  %1131 = vmatmul.mubr.bf16.gmra.mrb[0].mxu0 %v183
  %v1132 = vpop.f32.mrb[0].mxu0
  %v1133 = vadd.f32 %v1020, %v1132
  %v1134 = vpop.f32.mrb[0].mxu0
  %v1135 = vadd.f32 %v1022, %v1134
  %v1136 = vpop.f32.mrb[0].mxu0
  %v1137 = vadd.f32 %v1024, %v1136
  %v1138 = vpop.f32.mrb[0].mxu0
  %v1139 = vadd.f32 %v1026, %v1138
  %1140 = vmatprep.mubr.bf16.mxu0 %v191
  %1141 = vmatmul.mubr.bf16.gmra.mrb[0].mxu0 %v190
  %v1142 = vpop.f32.mrb[0].mxu0
  %v1143 = vadd.f32 %v1030, %v1142
  %v1144 = vpop.f32.mrb[0].mxu0
  %v1145 = vadd.f32 %v1032, %v1144
  %v1146 = vpop.f32.mrb[0].mxu0
  %v1147 = vadd.f32 %v1034, %v1146
  %v1148 = vpop.f32.mrb[0].mxu0
  %v1149 = vadd.f32 %v1036, %v1148
  %1150 = vmatprep.mubr.bf16.mxu0 %v198
  %1151 = vmatmul.mubr.bf16.gmra.mrb[0].mxu0 %v197
  %v1152 = vpop.f32.mrb[0].mxu0
  %v1153 = vadd.f32 %v1040, %v1152
  %v1154 = vpop.f32.mrb[0].mxu0
  %v1155 = vadd.f32 %v1042, %v1154
  %v1156 = vpop.f32.mrb[0].mxu0
  %v1157 = vadd.f32 %v1044, %v1156
  %v1158 = vpop.f32.mrb[0].mxu0
  %v1159 = vadd.f32 %v1046, %v1158
  %1160 = vmatprep.mubr.bf16.mxu0 %v205
  %1161 = vmatmul.mubr.bf16.gmra.mrb[0].mxu0 %v204
  %v1162 = vpop.f32.mrb[0].mxu0
  %v1163 = vadd.f32 %v1050, %v1162
  %v1164 = vpop.f32.mrb[0].mxu0
  %v1165 = vadd.f32 %v1052, %v1164
  %v1166 = vpop.f32.mrb[0].mxu0
  %v1167 = vadd.f32 %v1054, %v1166
  %v1168 = vpop.f32.mrb[0].mxu0
  %v1169 = vadd.f32 %v1056, %v1168
  %1170 = vdwg.mxu0
  %1171 = vmatprep.subr.bf16.mxu0 %v708
  %1172 = vmatpush1.bf16.msra.mxu0 %v707
  %1173 = vmatprep.subr.bf16.mxu0 0
  %1174 = vmatpush1.bf16.msra.mxu0 0
  %1175 = vmatprep.subr.bf16.mxu0 0
  %1176 = vmatpush1.bf16.msra.mxu0 0
  %1177 = vmatprep.subr.bf16.mxu0 0
  %1178 = vmatpush1.bf16.msra.mxu0 0
  %1179 = vmatprep.subr.bf16.mxu0 0
  %1180 = vmatpush1.bf16.msra.mxu0 0
  %1181 = vmatprep.subr.bf16.mxu0 0
  %1182 = vmatpush1.bf16.msra.mxu0 0
  %1183 = vmatprep.subr.bf16.mxu0 0
  %1184 = vmatpush1.bf16.msra.mxu0 0
  %1185 = vmatprep.subr.bf16.mxu0 0
  %1186 = vmatpush1.bf16.msra.mxu0 0
  %1187 = vmatprep.subr.bf16.mxu0 0
  %1188 = vmatpush1.bf16.msra.mxu0 0
  %1189 = vmatprep.subr.bf16.mxu0 0
  %1190 = vmatpush1.bf16.msra.mxu0 0
  %1191 = vmatprep.subr.bf16.mxu0 0
  %1192 = vmatpush1.bf16.msra.mxu0 0
  %1193 = vmatprep.subr.bf16.mxu0 0
  %1194 = vmatpush1.bf16.msra.mxu0 0
  %1195 = vmatprep.subr.bf16.mxu0 0
  %1196 = vmatpush1.bf16.msra.mxu0 0
  %1197 = vmatprep.subr.bf16.mxu0 0
  %1198 = vmatpush1.bf16.msra.mxu0 0
  %1199 = vmatprep.subr.bf16.mxu0 0
  %1200 = vmatpush1.bf16.msra.mxu0 0
  %1201 = vmatprep.subr.bf16.mxu0 0
  %1202 = vmatpush1.bf16.msra.mxu0 0
  %1203 = vmatprep.mubr.bf16.mxu0 0
  %1204 = vmatmul.mubr.bf16.gmra.mrb[0].mxu0 %v809
  %v1205 = vpop.f32.mrb[0].mxu0
  %v1206 = vadd.f32 %v1093, %v1205
  %v1207 = vpop.f32.mrb[0].mxu0
  %v1208 = vadd.f32 %v1095, %v1207
  %v1209 = vpop.f32.mrb[0].mxu0
  %v1210 = vadd.f32 %v1097, %v1209
  %v1211 = vpop.f32.mrb[0].mxu0
  %v1212 = vadd.f32 %v1099, %v1211
  %1213 = vmatprep.mubr.bf16.mxu0 0
  %1214 = vmatmul.mubr.bf16.gmra.mrb[0].mxu0 %v812
  %v1215 = vpop.f32.mrb[0].mxu0
  %v1216 = vadd.f32 %v1103, %v1215
  %v1217 = vpop.f32.mrb[0].mxu0
  %v1218 = vadd.f32 %v1105, %v1217
  %v1219 = vpop.f32.mrb[0].mxu0
  %v1220 = vadd.f32 %v1107, %v1219
  %v1221 = vpop.f32.mrb[0].mxu0
  %v1222 = vadd.f32 %v1109, %v1221
  %1223 = vmatprep.mubr.bf16.mxu0 0
  %1224 = vmatmul.mubr.bf16.gmra.mrb[0].mxu0 %v815
  %v1225 = vpop.f32.mrb[0].mxu0
  %v1226 = vadd.f32 %v1113, %v1225
  %v1227 = vpop.f32.mrb[0].mxu0
  %v1228 = vadd.f32 %v1115, %v1227
  %v1229 = vpop.f32.mrb[0].mxu0
  %v1230 = vadd.f32 %v1117, %v1229
  %v1231 = vpop.f32.mrb[0].mxu0
  %v1232 = vadd.f32 %v1119, %v1231
  %1233 = vmatprep.mubr.bf16.mxu0 0
  %1234 = vmatmul.mubr.bf16.gmra.mrb[0].mxu0 %v818
  %v1235 = vpop.f32.mrb[0].mxu0
  %v1236 = vadd.f32 %v1123, %v1235
  %v1237 = vpop.f32.mrb[0].mxu0
  %v1238 = vadd.f32 %v1125, %v1237
  %v1239 = vpop.f32.mrb[0].mxu0
  %v1240 = vadd.f32 %v1127, %v1239
  %v1241 = vpop.f32.mrb[0].mxu0
  %v1242 = vadd.f32 %v1129, %v1241
  %1243 = vmatprep.mubr.bf16.mxu0 0
  %1244 = vmatmul.mubr.bf16.gmra.mrb[0].mxu0 %v821
  %v1245 = vpop.f32.mrb[0].mxu0
  %v1246 = vadd.f32 %v1133, %v1245
  %v1247 = vpop.f32.mrb[0].mxu0
  %v1248 = vadd.f32 %v1135, %v1247
  %v1249 = vpop.f32.mrb[0].mxu0
  %v1250 = vadd.f32 %v1137, %v1249
  %v1251 = vpop.f32.mrb[0].mxu0
  %v1252 = vadd.f32 %v1139, %v1251
  %1253 = vmatprep.mubr.bf16.mxu0 0
  %1254 = vmatmul.mubr.bf16.gmra.mrb[0].mxu0 %v824
  %v1255 = vpop.f32.mrb[0].mxu0
  %v1256 = vadd.f32 %v1143, %v1255
  %v1257 = vpop.f32.mrb[0].mxu0
  %v1258 = vadd.f32 %v1145, %v1257
  %v1259 = vpop.f32.mrb[0].mxu0
  %v1260 = vadd.f32 %v1147, %v1259
  %v1261 = vpop.f32.mrb[0].mxu0
  %v1262 = vadd.f32 %v1149, %v1261
  %1263 = vmatprep.mubr.bf16.mxu0 0
  %1264 = vmatmul.mubr.bf16.gmra.mrb[0].mxu0 %v827
  %v1265 = vpop.f32.mrb[0].mxu0
  %v1266 = vadd.f32 %v1153, %v1265
  %v1267 = vpop.f32.mrb[0].mxu0
  %v1268 = vadd.f32 %v1155, %v1267
  %v1269 = vpop.f32.mrb[0].mxu0
  %v1270 = vadd.f32 %v1157, %v1269
  %v1271 = vpop.f32.mrb[0].mxu0
  %v1272 = vadd.f32 %v1159, %v1271
  %1273 = vmatprep.mubr.bf16.mxu0 0
  %1274 = vmatmul.mubr.bf16.gmra.mrb[0].mxu0 %v830
  %v1275 = vpop.f32.mrb[0].mxu0
  %v1276 = vadd.f32 %v1163, %v1275
  %v1277 = vpop.f32.mrb[0].mxu0
  %v1278 = vadd.f32 %v1165, %v1277
  %v1279 = vpop.f32.mrb[0].mxu0
  %v1280 = vadd.f32 %v1167, %v1279
  %v1281 = vpop.f32.mrb[0].mxu0
  %v1282 = vadd.f32 %v1169, %v1281
  %1283 = vdwg.mxu0
  %v1284 = vmax.f32 %v1206, 0.0
  %v1285 = vmax.f32 %v1208, 0.0
  %v1286 = vmax.f32 %v1210, 0.0
  %v1287 = vmax.f32 %v1212, 0.0
  %v1288 = vmax.f32 %v1216, 0.0
  %v1289 = vmax.f32 %v1218, 0.0
  %v1290 = vmax.f32 %v1220, 0.0
  %v1291 = vmax.f32 %v1222, 0.0
  %v1292 = vmax.f32 %v1226, 0.0
  %v1293 = vmax.f32 %v1228, 0.0
  %v1294 = vmax.f32 %v1230, 0.0
  %v1295 = vmax.f32 %v1232, 0.0
  %v1296 = vmax.f32 %v1236, 0.0
  %v1297 = vmax.f32 %v1238, 0.0
  %v1298 = vmax.f32 %v1240, 0.0
  %v1299 = vmax.f32 %v1242, 0.0
  %v1300 = vmax.f32 %v1246, 0.0
  %v1301 = vmax.f32 %v1248, 0.0
  %v1302 = vmax.f32 %v1250, 0.0
  %v1303 = vmax.f32 %v1252, 0.0
  %v1304 = vmax.f32 %v1256, 0.0
  %v1305 = vmax.f32 %v1258, 0.0
  %v1306 = vmax.f32 %v1260, 0.0
  %v1307 = vmax.f32 %v1262, 0.0
  %v1308 = vmax.f32 %v1266, 0.0
  %v1309 = vmax.f32 %v1268, 0.0
  %v1310 = vmax.f32 %v1270, 0.0
  %v1311 = vmax.f32 %v1272, 0.0
  %v1312 = vmax.f32 %v1276, 0.0
  %v1313 = vmax.f32 %v1278, 0.0
  %v1314 = vmax.f32 %v1280, 0.0
  %v1315 = vmax.f32 %v1282, 0.0
  %v1316 = vpack.c.bf16 %v1286, %v1284
  %v1317 = vpack.c.bf16 %v1287, %v1285
  %v1318 = vpack.c.bf16 %v1290, %v1288
  %v1319 = vpack.c.bf16 %v1291, %v1289
  %v1320 = vpack.c.bf16 %v1294, %v1292
  %v1321 = vpack.c.bf16 %v1295, %v1293
  %v1322 = vpack.c.bf16 %v1298, %v1296
  %v1323 = vpack.c.bf16 %v1299, %v1297
  %v1324 = vpack.c.bf16 %v1302, %v1300
  %v1325 = vpack.c.bf16 %v1303, %v1301
  %v1326 = vpack.c.bf16 %v1306, %v1304
  %v1327 = vpack.c.bf16 %v1307, %v1305
  %v1328 = vpack.c.bf16 %v1310, %v1308
  %v1329 = vpack.c.bf16 %v1311, %v1309
  %v1330 = vpack.c.bf16 %v1314, %v1312
  %v1331 = vpack.c.bf16 %v1315, %v1313
  %v1332 = vld [vmem:[%s3] sm:$0xf]
  %v1333 = vld [vmem:[%s3 + $0x4] sm:$0xf]
  %v1334 = vld [vmem:[%s3 + $0x8] sm:$0xf]
  %v1335 = vld [vmem:[%s3 + $0xc] sm:$0xf]
  %v1336 = vld [vmem:[%s3 + $0x10] sm:$0xf]
  %v1337 = vld [vmem:[%s3 + $0x14] sm:$0xf]
  %v1338 = vld [vmem:[%s3 + $0x18] sm:$0xf]
  %v1339 = vld [vmem:[%s3 + $0x1c] sm:$0xf]
  %v1340 = vld [vmem:[%s3 + $0x20] sm:$0xf]
  %v1341 = vld [vmem:[%s3 + $0x24] sm:$0xf]
  %v1342 = vld [vmem:[%s3 + $0x28] sm:$0xf]
  %v1343 = vld [vmem:[%s3 + $0x2c] sm:$0xf]
  %v1344 = vld [vmem:[%s3 + $0x30] sm:$0xf]
  %v1345 = vld [vmem:[%s3 + $0x34] sm:$0xf]
  %v1346 = vld [vmem:[%s3 + $0x38] sm:$0xf]
  %v1347 = vld [vmem:[%s3 + $0x3c] sm:$0xf]
  %v1348 = vld [vmem:[%s3 + $0x40] sm:$0xf]
  %v1349 = vld [vmem:[%s3 + $0x44] sm:$0xf]
  %v1350 = vld [vmem:[%s3 + $0x48] sm:$0xf]
  %v1351 = vld [vmem:[%s3 + $0x4c] sm:$0xf]
  %v1352 = vld [vmem:[%s3 + $0x50] sm:$0xf]
  %v1353 = vld [vmem:[%s3 + $0x54] sm:$0xf]
  %v1354 = vld [vmem:[%s3 + $0x58] sm:$0xf]
  %v1355 = vld [vmem:[%s3 + $0x5c] sm:$0xf]
  %v1356 = vld [vmem:[%s3 + $0x60] sm:$0xf]
  %v1357 = vld [vmem:[%s3 + $0x64] sm:$0xf]
  %v1358 = vld [vmem:[%s3 + $0x68] sm:$0xf]
  %v1359 = vld [vmem:[%s3 + $0x6c] sm:$0xf]
  %v1360 = vld [vmem:[%s3 + $0x70] sm:$0xf]
  %v1361 = vld [vmem:[%s3 + $0x74] sm:$0xf]
  %v1362 = vld [vmem:[%s3 + $0x78] sm:$0xf]
  %v1363 = vld [vmem:[%s3 + $0x7c] sm:$0xf]
  %v1364 = vld [vmem:[%s4] sm:$0x1]
  %v1366 = vlaneseq
  %v1367 = vshrl.u32 %v1366, 7
  %v1368 = vsub.s32 0, %v1367
  %v1369 = vrot.slane %v1364, %v1368
  %v1403 = vunpack.c.l.b16 %v1332
  %v1404 = vunpack.c.l.b16 %v1333
  %v1405 = vunpack.c.l.b16 %v1334
  %v1406 = vunpack.c.l.b16 %v1335
  %v1407 = vunpack.c.l.b16 %v1336
  %v1408 = vunpack.c.l.b16 %v1337
  %v1409 = vunpack.c.l.b16 %v1338
  %v1410 = vunpack.c.l.b16 %v1339
  %v1411 = vunpack.c.l.b16 %v1340
  %v1412 = vunpack.c.l.b16 %v1341
  %v1413 = vunpack.c.l.b16 %v1342
  %v1414 = vunpack.c.l.b16 %v1343
  %v1415 = vunpack.c.l.b16 %v1344
  %v1416 = vunpack.c.l.b16 %v1345
  %v1417 = vunpack.c.l.b16 %v1346
  %v1418 = vunpack.c.l.b16 %v1347
  %v1419 = vunpack.c.l.b16 %v1348
  %v1420 = vunpack.c.l.b16 %v1349
  %v1421 = vunpack.c.l.b16 %v1350
  %v1422 = vunpack.c.l.b16 %v1351
  %v1423 = vunpack.c.l.b16 %v1352
  %v1424 = vunpack.c.l.b16 %v1353
  %v1425 = vunpack.c.l.b16 %v1354
  %v1426 = vunpack.c.l.b16 %v1355
  %v1427 = vunpack.c.l.b16 %v1356
  %v1428 = vunpack.c.l.b16 %v1357
  %v1429 = vunpack.c.l.b16 %v1358
  %v1430 = vunpack.c.l.b16 %v1359
  %v1431 = vunpack.c.l.b16 %v1360
  %v1432 = vunpack.c.l.b16 %v1361
  %v1433 = vunpack.c.l.b16 %v1362
  %v1434 = vunpack.c.l.b16 %v1363
  %v1435 = vpack.c.b16 %v1404, %v1403
  %v1436 = vpack.c.b16 %v1406, %v1405
  %v1437 = vpack.c.b16 %v1408, %v1407
  %v1438 = vpack.c.b16 %v1410, %v1409
  %v1439 = vpack.c.b16 %v1412, %v1411
  %v1440 = vpack.c.b16 %v1414, %v1413
  %v1441 = vpack.c.b16 %v1416, %v1415
  %v1442 = vpack.c.b16 %v1418, %v1417
  %v1443 = vpack.c.b16 %v1420, %v1419
  %v1444 = vpack.c.b16 %v1422, %v1421
  %v1445 = vpack.c.b16 %v1424, %v1423
  %v1446 = vpack.c.b16 %v1426, %v1425
  %v1447 = vpack.c.b16 %v1428, %v1427
  %v1448 = vpack.c.b16 %v1430, %v1429
  %v1449 = vpack.c.b16 %v1432, %v1431
  %v1450 = vpack.c.b16 %v1434, %v1433
  %1467 = vmatprep.subr.bf16.mxu0 0
  %1468 = vmatpush1.bf16.msra.mxu0 %v1435
  %1469 = vmatprep.subr.bf16.mxu0 0
  %1470 = vmatpush1.bf16.msra.mxu0 %v1436
  %1471 = vmatprep.subr.bf16.mxu0 0
  %1472 = vmatpush1.bf16.msra.mxu0 %v1437
  %1473 = vmatprep.subr.bf16.mxu0 0
  %1474 = vmatpush1.bf16.msra.mxu0 %v1438
  %1475 = vmatprep.subr.bf16.mxu0 0
  %1476 = vmatpush1.bf16.msra.mxu0 %v1439
  %1477 = vmatprep.subr.bf16.mxu0 0
  %1478 = vmatpush1.bf16.msra.mxu0 %v1440
  %1479 = vmatprep.subr.bf16.mxu0 0
  %1480 = vmatpush1.bf16.msra.mxu0 %v1441
  %1481 = vmatprep.subr.bf16.mxu0 0
  %1482 = vmatpush1.bf16.msra.mxu0 %v1442
  %1483 = vmatprep.subr.bf16.mxu0 0
  %1484 = vmatpush1.bf16.msra.mxu0 %v1443
  %1485 = vmatprep.subr.bf16.mxu0 0
  %1486 = vmatpush1.bf16.msra.mxu0 %v1444
  %1487 = vmatprep.subr.bf16.mxu0 0
  %1488 = vmatpush1.bf16.msra.mxu0 %v1445
  %1489 = vmatprep.subr.bf16.mxu0 0
  %1490 = vmatpush1.bf16.msra.mxu0 %v1446
  %1491 = vmatprep.subr.bf16.mxu0 0
  %1492 = vmatpush1.bf16.msra.mxu0 %v1447
  %1493 = vmatprep.subr.bf16.mxu0 0
  %1494 = vmatpush1.bf16.msra.mxu0 %v1448
  %1495 = vmatprep.subr.bf16.mxu0 0
  %1496 = vmatpush1.bf16.msra.mxu0 %v1449
  %1497 = vmatprep.subr.bf16.mxu0 0
  %1498 = vmatpush1.bf16.msra.mxu0 %v1450
  %1499 = vmatprep.mubr.bf16.mxu0 %v1317
  %1500 = vmatmul.mubr.bf16.gmra.mrb[0].mxu0 %v1316
  %v1501 = vpop.f32.mrb[0].mxu0
  %v1502 = vadd.f32 %v1369, %v1501
  %v1503 = vpop.f32.mrb[0].mxu0
  %v1504 = vpop.f32.mrb[0].mxu0
  %v1505 = vadd.f32 %v1369, %v1504
  %v1506 = vpop.f32.mrb[0].mxu0
  %1507 = vmatprep.mubr.bf16.mxu0 %v1319
  %1508 = vmatmul.mubr.bf16.gmra.mrb[0].mxu0 %v1318
  %v1509 = vpop.f32.mrb[0].mxu0
  %v1510 = vadd.f32 %v1369, %v1509
  %v1511 = vpop.f32.mrb[0].mxu0
  %v1512 = vpop.f32.mrb[0].mxu0
  %v1513 = vadd.f32 %v1369, %v1512
  %v1514 = vpop.f32.mrb[0].mxu0
  %1515 = vmatprep.mubr.bf16.mxu0 %v1321
  %1516 = vmatmul.mubr.bf16.gmra.mrb[0].mxu0 %v1320
  %v1517 = vpop.f32.mrb[0].mxu0
  %v1518 = vadd.f32 %v1369, %v1517
  %v1519 = vpop.f32.mrb[0].mxu0
  %v1520 = vpop.f32.mrb[0].mxu0
  %v1521 = vadd.f32 %v1369, %v1520
  %v1522 = vpop.f32.mrb[0].mxu0
  %1523 = vmatprep.mubr.bf16.mxu0 %v1323
  %1524 = vmatmul.mubr.bf16.gmra.mrb[0].mxu0 %v1322
  %v1525 = vpop.f32.mrb[0].mxu0
  %v1526 = vadd.f32 %v1369, %v1525
  %v1527 = vpop.f32.mrb[0].mxu0
  %v1528 = vpop.f32.mrb[0].mxu0
  %v1529 = vadd.f32 %v1369, %v1528
  %v1530 = vpop.f32.mrb[0].mxu0
  %1531 = vmatprep.mubr.bf16.mxu0 %v1325
  %1532 = vmatmul.mubr.bf16.gmra.mrb[0].mxu0 %v1324
  %v1533 = vpop.f32.mrb[0].mxu0
  %v1534 = vadd.f32 %v1369, %v1533
  %v1535 = vpop.f32.mrb[0].mxu0
  %v1536 = vpop.f32.mrb[0].mxu0
  %v1537 = vadd.f32 %v1369, %v1536
  %v1538 = vpop.f32.mrb[0].mxu0
  %1539 = vmatprep.mubr.bf16.mxu0 %v1327
  %1540 = vmatmul.mubr.bf16.gmra.mrb[0].mxu0 %v1326
  %v1541 = vpop.f32.mrb[0].mxu0
  %v1542 = vadd.f32 %v1369, %v1541
  %v1543 = vpop.f32.mrb[0].mxu0
  %v1544 = vpop.f32.mrb[0].mxu0
  %v1545 = vadd.f32 %v1369, %v1544
  %v1546 = vpop.f32.mrb[0].mxu0
  %1547 = vmatprep.mubr.bf16.mxu0 %v1329
  %1548 = vmatmul.mubr.bf16.gmra.mrb[0].mxu0 %v1328
  %v1549 = vpop.f32.mrb[0].mxu0
  %v1550 = vadd.f32 %v1369, %v1549
  %v1551 = vpop.f32.mrb[0].mxu0
  %v1552 = vpop.f32.mrb[0].mxu0
  %v1553 = vadd.f32 %v1369, %v1552
  %v1554 = vpop.f32.mrb[0].mxu0
  %1555 = vmatprep.mubr.bf16.mxu0 %v1331
  %1556 = vmatmul.mubr.bf16.gmra.mrb[0].mxu0 %v1330
  %v1557 = vpop.f32.mrb[0].mxu0
  %v1558 = vadd.f32 %v1369, %v1557
  %v1559 = vpop.f32.mrb[0].mxu0
  %v1560 = vpop.f32.mrb[0].mxu0
  %v1561 = vadd.f32 %v1369, %v1560
  %v1562 = vpop.f32.mrb[0].mxu0
  %1563 = vdwg.mxu0
  %v1564 = vmax.f32 %v1502, 0.0
  %v1565 = vmax.f32 %v1505, 0.0
  %v1566 = vmax.f32 %v1510, 0.0
  %v1567 = vmax.f32 %v1513, 0.0
  %v1568 = vmax.f32 %v1518, 0.0
  %v1569 = vmax.f32 %v1521, 0.0
  %v1570 = vmax.f32 %v1526, 0.0
  %v1571 = vmax.f32 %v1529, 0.0
  %v1572 = vmax.f32 %v1534, 0.0
  %v1573 = vmax.f32 %v1537, 0.0
  %v1574 = vmax.f32 %v1542, 0.0
  %v1575 = vmax.f32 %v1545, 0.0
  %v1576 = vmax.f32 %v1550, 0.0
  %v1577 = vmax.f32 %v1553, 0.0
  %v1578 = vmax.f32 %v1558, 0.0
  %v1579 = vmax.f32 %v1561, 0.0
  %v1580 = vpack.c.bf16 %v1565, %v1564
  %v1581 = vpack.c.bf16 %v1567, %v1566
  %v1582 = vpack.c.bf16 %v1569, %v1568
  %v1583 = vpack.c.bf16 %v1571, %v1570
  %v1584 = vpack.c.bf16 %v1573, %v1572
  %v1585 = vpack.c.bf16 %v1575, %v1574
  %v1586 = vpack.c.bf16 %v1577, %v1576
  %v1587 = vpack.c.bf16 %v1579, %v1578
  %v1588 = vld [vmem:[%s5] sm:$0xf]
  %v1589 = vld [vmem:[%s5 + $0x4] sm:$0xf]
  %v1590 = vld [vmem:[%s5 + $0x8] sm:$0xf]
  %v1591 = vld [vmem:[%s5 + $0xc] sm:$0xf]
  %v1592 = vld [vmem:[%s5 + $0x10] sm:$0xf]
  %v1593 = vld [vmem:[%s5 + $0x14] sm:$0xf]
  %v1594 = vld [vmem:[%s5 + $0x18] sm:$0xf]
  %v1595 = vld [vmem:[%s5 + $0x1c] sm:$0xf]
  %v1596 = vld [vmem:[%s5 + $0x20] sm:$0xf]
  %v1597 = vld [vmem:[%s5 + $0x24] sm:$0xf]
  %v1598 = vld [vmem:[%s5 + $0x28] sm:$0xf]
  %v1599 = vld [vmem:[%s5 + $0x2c] sm:$0xf]
  %v1600 = vld [vmem:[%s5 + $0x30] sm:$0xf]
  %v1601 = vld [vmem:[%s5 + $0x34] sm:$0xf]
  %v1602 = vld [vmem:[%s5 + $0x38] sm:$0xf]
  %v1603 = vld [vmem:[%s5 + $0x3c] sm:$0xf]
  %v1604 = vld [vmem:[%s6] sm:$0x1]
  %v1606 = vlaneseq
  %v1607 = vshrl.u32 %v1606, 7
  %v1608 = vsub.s32 0, %v1607
  %v1609 = vrot.slane %v1604, %v1608
  %v1627 = vunpack.c.l.b16 %v1588
  %v1628 = vunpack.c.l.b16 %v1589
  %v1629 = vunpack.c.l.b16 %v1590
  %v1630 = vunpack.c.l.b16 %v1591
  %v1631 = vunpack.c.l.b16 %v1592
  %v1632 = vunpack.c.l.b16 %v1593
  %v1633 = vunpack.c.l.b16 %v1594
  %v1634 = vunpack.c.l.b16 %v1595
  %v1635 = vunpack.c.l.b16 %v1596
  %v1636 = vunpack.c.l.b16 %v1597
  %v1637 = vunpack.c.l.b16 %v1598
  %v1638 = vunpack.c.l.b16 %v1599
  %v1639 = vunpack.c.l.b16 %v1600
  %v1640 = vunpack.c.l.b16 %v1601
  %v1641 = vunpack.c.l.b16 %v1602
  %v1642 = vunpack.c.l.b16 %v1603
  %v1643 = vpack.c.b16 %v1628, %v1627
  %v1644 = vpack.c.b16 %v1630, %v1629
  %v1645 = vpack.c.b16 %v1632, %v1631
  %v1646 = vpack.c.b16 %v1634, %v1633
  %v1647 = vpack.c.b16 %v1636, %v1635
  %v1648 = vpack.c.b16 %v1638, %v1637
  %v1649 = vpack.c.b16 %v1640, %v1639
  %v1650 = vpack.c.b16 %v1642, %v1641
  %1659 = vmatprep.subr.bf16.mxu0 0
  %1660 = vmatpush1.bf16.msra.mxu0 %v1643
  %1661 = vmatprep.subr.bf16.mxu0 0
  %1662 = vmatpush1.bf16.msra.mxu0 %v1644
  %1663 = vmatprep.subr.bf16.mxu0 0
  %1664 = vmatpush1.bf16.msra.mxu0 %v1645
  %1665 = vmatprep.subr.bf16.mxu0 0
  %1666 = vmatpush1.bf16.msra.mxu0 %v1646
  %1667 = vmatprep.subr.bf16.mxu0 0
  %1668 = vmatpush1.bf16.msra.mxu0 %v1647
  %1669 = vmatprep.subr.bf16.mxu0 0
  %1670 = vmatpush1.bf16.msra.mxu0 %v1648
  %1671 = vmatprep.subr.bf16.mxu0 0
  %1672 = vmatpush1.bf16.msra.mxu0 %v1649
  %1673 = vmatprep.subr.bf16.mxu0 0
  %1674 = vmatpush1.bf16.msra.mxu0 %v1650
  %1675 = vmatprep.subr.bf16.mxu0 0
  %1676 = vmatpush1.bf16.msra.mxu0 0
  %1677 = vmatprep.subr.bf16.mxu0 0
  %1678 = vmatpush1.bf16.msra.mxu0 0
  %1679 = vmatprep.subr.bf16.mxu0 0
  %1680 = vmatpush1.bf16.msra.mxu0 0
  %1681 = vmatprep.subr.bf16.mxu0 0
  %1682 = vmatpush1.bf16.msra.mxu0 0
  %1683 = vmatprep.subr.bf16.mxu0 0
  %1684 = vmatpush1.bf16.msra.mxu0 0
  %1685 = vmatprep.subr.bf16.mxu0 0
  %1686 = vmatpush1.bf16.msra.mxu0 0
  %1687 = vmatprep.subr.bf16.mxu0 0
  %1688 = vmatpush1.bf16.msra.mxu0 0
  %1689 = vmatprep.subr.bf16.mxu0 0
  %1690 = vmatpush1.bf16.msra.mxu0 0
  %1691 = vmatprep.mubr.bf16.mxu0 0
  %1692 = vmatmul.mubr.bf16.gmra.mrb[0].mxu0 %v1580
  %v1693 = vpop.f32.mrb[0].mxu0
  %v1694 = vadd.f32 %v1609, %v1693
  %v1695 = vpop.f32.mrb[0].mxu0
  %v1696 = vpop.f32.mrb[0].mxu0
  %v1697 = vadd.f32 %v1609, %v1696
  %v1698 = vpop.f32.mrb[0].mxu0
  %1699 = vmatprep.mubr.bf16.mxu0 0
  %1700 = vmatmul.mubr.bf16.gmra.mrb[0].mxu0 %v1581
  %v1701 = vpop.f32.mrb[0].mxu0
  %v1702 = vadd.f32 %v1609, %v1701
  %v1703 = vpop.f32.mrb[0].mxu0
  %v1704 = vpop.f32.mrb[0].mxu0
  %v1705 = vadd.f32 %v1609, %v1704
  %v1706 = vpop.f32.mrb[0].mxu0
  %1707 = vmatprep.mubr.bf16.mxu0 0
  %1708 = vmatmul.mubr.bf16.gmra.mrb[0].mxu0 %v1582
  %v1709 = vpop.f32.mrb[0].mxu0
  %v1710 = vadd.f32 %v1609, %v1709
  %v1711 = vpop.f32.mrb[0].mxu0
  %v1712 = vpop.f32.mrb[0].mxu0
  %v1713 = vadd.f32 %v1609, %v1712
  %v1714 = vpop.f32.mrb[0].mxu0
  %1715 = vmatprep.mubr.bf16.mxu0 0
  %1716 = vmatmul.mubr.bf16.gmra.mrb[0].mxu0 %v1583
  %v1717 = vpop.f32.mrb[0].mxu0
  %v1718 = vadd.f32 %v1609, %v1717
  %v1719 = vpop.f32.mrb[0].mxu0
  %v1720 = vpop.f32.mrb[0].mxu0
  %v1721 = vadd.f32 %v1609, %v1720
  %v1722 = vpop.f32.mrb[0].mxu0
  %1723 = vmatprep.mubr.bf16.mxu0 0
  %1724 = vmatmul.mubr.bf16.gmra.mrb[0].mxu0 %v1584
  %v1725 = vpop.f32.mrb[0].mxu0
  %v1726 = vadd.f32 %v1609, %v1725
  %v1727 = vpop.f32.mrb[0].mxu0
  %v1728 = vpop.f32.mrb[0].mxu0
  %v1729 = vadd.f32 %v1609, %v1728
  %v1730 = vpop.f32.mrb[0].mxu0
  %1731 = vmatprep.mubr.bf16.mxu0 0
  %1732 = vmatmul.mubr.bf16.gmra.mrb[0].mxu0 %v1585
  %v1733 = vpop.f32.mrb[0].mxu0
  %v1734 = vadd.f32 %v1609, %v1733
  %v1735 = vpop.f32.mrb[0].mxu0
  %v1736 = vpop.f32.mrb[0].mxu0
  %v1737 = vadd.f32 %v1609, %v1736
  %v1738 = vpop.f32.mrb[0].mxu0
  %1739 = vmatprep.mubr.bf16.mxu0 0
  %1740 = vmatmul.mubr.bf16.gmra.mrb[0].mxu0 %v1586
  %v1741 = vpop.f32.mrb[0].mxu0
  %v1742 = vadd.f32 %v1609, %v1741
  %v1743 = vpop.f32.mrb[0].mxu0
  %v1744 = vpop.f32.mrb[0].mxu0
  %v1745 = vadd.f32 %v1609, %v1744
  %v1746 = vpop.f32.mrb[0].mxu0
  %1747 = vmatprep.mubr.bf16.mxu0 0
  %1748 = vmatmul.mubr.bf16.gmra.mrb[0].mxu0 %v1587
  %v1749 = vpop.f32.mrb[0].mxu0
  %v1750 = vadd.f32 %v1609, %v1749
  %v1751 = vpop.f32.mrb[0].mxu0
  %v1752 = vpop.f32.mrb[0].mxu0
  %v1753 = vadd.f32 %v1609, %v1752
  %v1754 = vpop.f32.mrb[0].mxu0
  %1755 = vdwg.mxu0
  %v1756 = vmax.f32 %v1694, 0.0
  %v1757 = vmax.f32 %v1697, 0.0
  %v1758 = vmax.f32 %v1702, 0.0
  %v1759 = vmax.f32 %v1705, 0.0
  %v1760 = vmax.f32 %v1710, 0.0
  %v1761 = vmax.f32 %v1713, 0.0
  %v1762 = vmax.f32 %v1718, 0.0
  %v1763 = vmax.f32 %v1721, 0.0
  %v1764 = vmax.f32 %v1726, 0.0
  %v1765 = vmax.f32 %v1729, 0.0
  %v1766 = vmax.f32 %v1734, 0.0
  %v1767 = vmax.f32 %v1737, 0.0
  %v1768 = vmax.f32 %v1742, 0.0
  %v1769 = vmax.f32 %v1745, 0.0
  %v1770 = vmax.f32 %v1750, 0.0
  %v1771 = vmax.f32 %v1753, 0.0
  %v1772 = vpack.c.bf16 %v1757, %v1756
  %v1773 = vpack.c.bf16 %v1759, %v1758
  %v1774 = vpack.c.bf16 %v1761, %v1760
  %v1775 = vpack.c.bf16 %v1763, %v1762
  %v1776 = vpack.c.bf16 %v1765, %v1764
  %v1777 = vpack.c.bf16 %v1767, %v1766
  %v1778 = vpack.c.bf16 %v1769, %v1768
  %v1779 = vpack.c.bf16 %v1771, %v1770
  %v1780 = vld [vmem:[%s7] sm:$0xf]
  %v1781 = vld [vmem:[%s7 + $0x4] sm:$0xf]
  %v1782 = vld [vmem:[%s7 + $0x8] sm:$0xf]
  %v1783 = vld [vmem:[%s7 + $0xc] sm:$0xf]
  %v1784 = vld [vmem:[%s7 + $0x10] sm:$0xf]
  %v1785 = vld [vmem:[%s7 + $0x14] sm:$0xf]
  %v1786 = vld [vmem:[%s7 + $0x18] sm:$0xf]
  %v1787 = vld [vmem:[%s7 + $0x1c] sm:$0xf]
  %v1788 = vld [vmem:[%s7 + $0x20] sm:$0xf]
  %v1789 = vld [vmem:[%s7 + $0x24] sm:$0xf]
  %v1790 = vld [vmem:[%s7 + $0x28] sm:$0xf]
  %v1791 = vld [vmem:[%s7 + $0x2c] sm:$0xf]
  %v1792 = vld [vmem:[%s7 + $0x30] sm:$0xf]
  %v1793 = vld [vmem:[%s7 + $0x34] sm:$0xf]
  %v1794 = vld [vmem:[%s7 + $0x38] sm:$0xf]
  %v1795 = vld [vmem:[%s7 + $0x3c] sm:$0xf]
  %v1796 = vld [vmem:[%s8] sm:$0x1]
  %v1798 = vlaneseq
  %v1799 = vshrl.u32 %v1798, 7
  %v1800 = vsub.s32 0, %v1799
  %v1801 = vrot.slane %v1796, %v1800
  %v1819 = vunpack.c.l.b16 %v1780
  %v1820 = vunpack.c.l.b16 %v1781
  %v1821 = vunpack.c.l.b16 %v1782
  %v1822 = vunpack.c.l.b16 %v1783
  %v1823 = vunpack.c.l.b16 %v1784
  %v1824 = vunpack.c.l.b16 %v1785
  %v1825 = vunpack.c.l.b16 %v1786
  %v1826 = vunpack.c.l.b16 %v1787
  %v1827 = vunpack.c.l.b16 %v1788
  %v1828 = vunpack.c.l.b16 %v1789
  %v1829 = vunpack.c.l.b16 %v1790
  %v1830 = vunpack.c.l.b16 %v1791
  %v1831 = vunpack.c.l.b16 %v1792
  %v1832 = vunpack.c.l.b16 %v1793
  %v1833 = vunpack.c.l.b16 %v1794
  %v1834 = vunpack.c.l.b16 %v1795
  %v1835 = vpack.c.b16 %v1820, %v1819
  %v1836 = vpack.c.b16 %v1822, %v1821
  %v1837 = vpack.c.b16 %v1824, %v1823
  %v1838 = vpack.c.b16 %v1826, %v1825
  %v1839 = vpack.c.b16 %v1828, %v1827
  %v1840 = vpack.c.b16 %v1830, %v1829
  %v1841 = vpack.c.b16 %v1832, %v1831
  %v1842 = vpack.c.b16 %v1834, %v1833
  %1851 = vmatprep.subr.bf16.mxu0 0
  %1852 = vmatpush1.bf16.msra.mxu0 %v1835
  %1853 = vmatprep.subr.bf16.mxu0 0
  %1854 = vmatpush1.bf16.msra.mxu0 %v1836
  %1855 = vmatprep.subr.bf16.mxu0 0
  %1856 = vmatpush1.bf16.msra.mxu0 %v1837
  %1857 = vmatprep.subr.bf16.mxu0 0
  %1858 = vmatpush1.bf16.msra.mxu0 %v1838
  %1859 = vmatprep.subr.bf16.mxu0 0
  %1860 = vmatpush1.bf16.msra.mxu0 %v1839
  %1861 = vmatprep.subr.bf16.mxu0 0
  %1862 = vmatpush1.bf16.msra.mxu0 %v1840
  %1863 = vmatprep.subr.bf16.mxu0 0
  %1864 = vmatpush1.bf16.msra.mxu0 %v1841
  %1865 = vmatprep.subr.bf16.mxu0 0
  %1866 = vmatpush1.bf16.msra.mxu0 %v1842
  %1867 = vmatprep.subr.bf16.mxu0 0
  %1868 = vmatpush1.bf16.msra.mxu0 0
  %1869 = vmatprep.subr.bf16.mxu0 0
  %1870 = vmatpush1.bf16.msra.mxu0 0
  %1871 = vmatprep.subr.bf16.mxu0 0
  %1872 = vmatpush1.bf16.msra.mxu0 0
  %1873 = vmatprep.subr.bf16.mxu0 0
  %1874 = vmatpush1.bf16.msra.mxu0 0
  %1875 = vmatprep.subr.bf16.mxu0 0
  %1876 = vmatpush1.bf16.msra.mxu0 0
  %1877 = vmatprep.subr.bf16.mxu0 0
  %1878 = vmatpush1.bf16.msra.mxu0 0
  %1879 = vmatprep.subr.bf16.mxu0 0
  %1880 = vmatpush1.bf16.msra.mxu0 0
  %1881 = vmatprep.subr.bf16.mxu0 0
  %1882 = vmatpush1.bf16.msra.mxu0 0
  %1883 = vmatprep.mubr.bf16.mxu0 0
  %1884 = vmatmul.mubr.bf16.gmra.mrb[0].mxu0 %v1772
  %v1885 = vpop.f32.mrb[0].mxu0
  %v1886 = vadd.f32 %v1801, %v1885
  %v1887 = vpop.f32.mrb[0].mxu0
  %v1888 = vpop.f32.mrb[0].mxu0
  %v1889 = vadd.f32 %v1801, %v1888
  %v1890 = vpop.f32.mrb[0].mxu0
  %1891 = vmatprep.mubr.bf16.mxu0 0
  %1892 = vmatmul.mubr.bf16.gmra.mrb[0].mxu0 %v1773
  %v1893 = vpop.f32.mrb[0].mxu0
  %v1894 = vadd.f32 %v1801, %v1893
  %v1895 = vpop.f32.mrb[0].mxu0
  %v1896 = vpop.f32.mrb[0].mxu0
  %v1897 = vadd.f32 %v1801, %v1896
  %v1898 = vpop.f32.mrb[0].mxu0
  %1899 = vmatprep.mubr.bf16.mxu0 0
  %1900 = vmatmul.mubr.bf16.gmra.mrb[0].mxu0 %v1774
  %v1901 = vpop.f32.mrb[0].mxu0
  %v1902 = vadd.f32 %v1801, %v1901
  %v1903 = vpop.f32.mrb[0].mxu0
  %v1904 = vpop.f32.mrb[0].mxu0
  %v1905 = vadd.f32 %v1801, %v1904
  %v1906 = vpop.f32.mrb[0].mxu0
  %1907 = vmatprep.mubr.bf16.mxu0 0
  %1908 = vmatmul.mubr.bf16.gmra.mrb[0].mxu0 %v1775
  %v1909 = vpop.f32.mrb[0].mxu0
  %v1910 = vadd.f32 %v1801, %v1909
  %v1911 = vpop.f32.mrb[0].mxu0
  %v1912 = vpop.f32.mrb[0].mxu0
  %v1913 = vadd.f32 %v1801, %v1912
  %v1914 = vpop.f32.mrb[0].mxu0
  %1915 = vmatprep.mubr.bf16.mxu0 0
  %1916 = vmatmul.mubr.bf16.gmra.mrb[0].mxu0 %v1776
  %v1917 = vpop.f32.mrb[0].mxu0
  %v1918 = vadd.f32 %v1801, %v1917
  %v1919 = vpop.f32.mrb[0].mxu0
  %v1920 = vpop.f32.mrb[0].mxu0
  %v1921 = vadd.f32 %v1801, %v1920
  %v1922 = vpop.f32.mrb[0].mxu0
  %1923 = vmatprep.mubr.bf16.mxu0 0
  %1924 = vmatmul.mubr.bf16.gmra.mrb[0].mxu0 %v1777
  %v1925 = vpop.f32.mrb[0].mxu0
  %v1926 = vadd.f32 %v1801, %v1925
  %v1927 = vpop.f32.mrb[0].mxu0
  %v1928 = vpop.f32.mrb[0].mxu0
  %v1929 = vadd.f32 %v1801, %v1928
  %v1930 = vpop.f32.mrb[0].mxu0
  %1931 = vmatprep.mubr.bf16.mxu0 0
  %1932 = vmatmul.mubr.bf16.gmra.mrb[0].mxu0 %v1778
  %v1933 = vpop.f32.mrb[0].mxu0
  %v1934 = vadd.f32 %v1801, %v1933
  %v1935 = vpop.f32.mrb[0].mxu0
  %v1936 = vpop.f32.mrb[0].mxu0
  %v1937 = vadd.f32 %v1801, %v1936
  %v1938 = vpop.f32.mrb[0].mxu0
  %1939 = vmatprep.mubr.bf16.mxu0 0
  %1940 = vmatmul.mubr.bf16.gmra.mrb[0].mxu0 %v1779
  %v1941 = vpop.f32.mrb[0].mxu0
  %v1942 = vadd.f32 %v1801, %v1941
  %v1943 = vpop.f32.mrb[0].mxu0
  %v1944 = vpop.f32.mrb[0].mxu0
  %v1945 = vadd.f32 %v1801, %v1944
  %v1946 = vpop.f32.mrb[0].mxu0
  %1947 = vdwg.mxu0
  %v1948 = vmax.f32 %v1886, 0.0
  %v1949 = vmax.f32 %v1889, 0.0
  %v1950 = vmax.f32 %v1894, 0.0
  %v1951 = vmax.f32 %v1897, 0.0
  %v1952 = vmax.f32 %v1902, 0.0
  %v1953 = vmax.f32 %v1905, 0.0
  %v1954 = vmax.f32 %v1910, 0.0
  %v1955 = vmax.f32 %v1913, 0.0
  %v1956 = vmax.f32 %v1918, 0.0
  %v1957 = vmax.f32 %v1921, 0.0
  %v1958 = vmax.f32 %v1926, 0.0
  %v1959 = vmax.f32 %v1929, 0.0
  %v1960 = vmax.f32 %v1934, 0.0
  %v1961 = vmax.f32 %v1937, 0.0
  %v1962 = vmax.f32 %v1942, 0.0
  %v1963 = vmax.f32 %v1945, 0.0
  %v1964 = vpack.c.bf16 %v1949, %v1948
  %v1965 = vpack.c.bf16 %v1951, %v1950
  %v1966 = vpack.c.bf16 %v1953, %v1952
  %v1967 = vpack.c.bf16 %v1955, %v1954
  %v1968 = vpack.c.bf16 %v1957, %v1956
  %v1969 = vpack.c.bf16 %v1959, %v1958
  %v1970 = vpack.c.bf16 %v1961, %v1960
  %v1971 = vpack.c.bf16 %v1963, %v1962
  %v1972 = vld [vmem:[%s9] sm:$0xf]
  %v1973 = vld [vmem:[%s9 + $0x4] sm:$0xf]
  %v1974 = vld [vmem:[%s9 + $0x8] sm:$0xf]
  %v1975 = vld [vmem:[%s9 + $0xc] sm:$0xf]
  %v1976 = vld [vmem:[%s9 + $0x10] sm:$0xf]
  %v1977 = vld [vmem:[%s9 + $0x14] sm:$0xf]
  %v1978 = vld [vmem:[%s9 + $0x18] sm:$0xf]
  %v1979 = vld [vmem:[%s9 + $0x1c] sm:$0xf]
  %v1980 = vld [vmem:[%s9 + $0x20] sm:$0xf]
  %v1981 = vld [vmem:[%s9 + $0x24] sm:$0xf]
  %v1982 = vld [vmem:[%s9 + $0x28] sm:$0xf]
  %v1983 = vld [vmem:[%s9 + $0x2c] sm:$0xf]
  %v1984 = vld [vmem:[%s9 + $0x30] sm:$0xf]
  %v1985 = vld [vmem:[%s9 + $0x34] sm:$0xf]
  %v1986 = vld [vmem:[%s9 + $0x38] sm:$0xf]
  %v1987 = vld [vmem:[%s9 + $0x3c] sm:$0xf]
  %v1988 = vld [vmem:[%s10] sm:$0x1]
  %v1990 = vlaneseq
  %v1991 = vshrl.u32 %v1990, 7
  %v1992 = vsub.s32 0, %v1991
  %v1993 = vrot.slane %v1988, %v1992
  %v2011 = vunpack.c.l.b16 %v1972
  %v2012 = vunpack.c.l.b16 %v1973
  %v2013 = vunpack.c.l.b16 %v1974
  %v2014 = vunpack.c.l.b16 %v1975
  %v2015 = vunpack.c.l.b16 %v1976
  %v2016 = vunpack.c.l.b16 %v1977
  %v2017 = vunpack.c.l.b16 %v1978
  %v2018 = vunpack.c.l.b16 %v1979
  %v2019 = vunpack.c.l.b16 %v1980
  %v2020 = vunpack.c.l.b16 %v1981
  %v2021 = vunpack.c.l.b16 %v1982
  %v2022 = vunpack.c.l.b16 %v1983
  %v2023 = vunpack.c.l.b16 %v1984
  %v2024 = vunpack.c.l.b16 %v1985
  %v2025 = vunpack.c.l.b16 %v1986
  %v2026 = vunpack.c.l.b16 %v1987
  %v2027 = vpack.c.b16 %v2012, %v2011
  %v2028 = vpack.c.b16 %v2014, %v2013
  %v2029 = vpack.c.b16 %v2016, %v2015
  %v2030 = vpack.c.b16 %v2018, %v2017
  %v2031 = vpack.c.b16 %v2020, %v2019
  %v2032 = vpack.c.b16 %v2022, %v2021
  %v2033 = vpack.c.b16 %v2024, %v2023
  %v2034 = vpack.c.b16 %v2026, %v2025
  %2043 = vmatprep.subr.bf16.mxu0 0
  %2044 = vmatpush1.bf16.msra.mxu0 %v2027
  %2045 = vmatprep.subr.bf16.mxu0 0
  %2046 = vmatpush1.bf16.msra.mxu0 %v2028
  %2047 = vmatprep.subr.bf16.mxu0 0
  %2048 = vmatpush1.bf16.msra.mxu0 %v2029
  %2049 = vmatprep.subr.bf16.mxu0 0
  %2050 = vmatpush1.bf16.msra.mxu0 %v2030
  %2051 = vmatprep.subr.bf16.mxu0 0
  %2052 = vmatpush1.bf16.msra.mxu0 %v2031
  %2053 = vmatprep.subr.bf16.mxu0 0
  %2054 = vmatpush1.bf16.msra.mxu0 %v2032
  %2055 = vmatprep.subr.bf16.mxu0 0
  %2056 = vmatpush1.bf16.msra.mxu0 %v2033
  %2057 = vmatprep.subr.bf16.mxu0 0
  %2058 = vmatpush1.bf16.msra.mxu0 %v2034
  %2059 = vmatprep.subr.bf16.mxu0 0
  %2060 = vmatpush1.bf16.msra.mxu0 0
  %2061 = vmatprep.subr.bf16.mxu0 0
  %2062 = vmatpush1.bf16.msra.mxu0 0
  %2063 = vmatprep.subr.bf16.mxu0 0
  %2064 = vmatpush1.bf16.msra.mxu0 0
  %2065 = vmatprep.subr.bf16.mxu0 0
  %2066 = vmatpush1.bf16.msra.mxu0 0
  %2067 = vmatprep.subr.bf16.mxu0 0
  %2068 = vmatpush1.bf16.msra.mxu0 0
  %2069 = vmatprep.subr.bf16.mxu0 0
  %2070 = vmatpush1.bf16.msra.mxu0 0
  %2071 = vmatprep.subr.bf16.mxu0 0
  %2072 = vmatpush1.bf16.msra.mxu0 0
  %2073 = vmatprep.subr.bf16.mxu0 0
  %2074 = vmatpush1.bf16.msra.mxu0 0
  %2075 = vmatprep.mubr.bf16.mxu0 0
  %2076 = vmatmul.mubr.bf16.gmra.mrb[0].mxu0 %v1964
  %v2077 = vpop.f32.mrb[0].mxu0
  %v2078 = vadd.f32 %v1993, %v2077
  %v2079 = vpop.f32.mrb[0].mxu0
  %v2080 = vpop.f32.mrb[0].mxu0
  %v2081 = vadd.f32 %v1993, %v2080
  %v2082 = vpop.f32.mrb[0].mxu0
  %2083 = vmatprep.mubr.bf16.mxu0 0
  %2084 = vmatmul.mubr.bf16.gmra.mrb[0].mxu0 %v1965
  %v2085 = vpop.f32.mrb[0].mxu0
  %v2086 = vadd.f32 %v1993, %v2085
  %v2087 = vpop.f32.mrb[0].mxu0
  %v2088 = vpop.f32.mrb[0].mxu0
  %v2089 = vadd.f32 %v1993, %v2088
  %v2090 = vpop.f32.mrb[0].mxu0
  %2091 = vmatprep.mubr.bf16.mxu0 0
  %2092 = vmatmul.mubr.bf16.gmra.mrb[0].mxu0 %v1966
  %v2093 = vpop.f32.mrb[0].mxu0
  %v2094 = vadd.f32 %v1993, %v2093
  %v2095 = vpop.f32.mrb[0].mxu0
  %v2096 = vpop.f32.mrb[0].mxu0
  %v2097 = vadd.f32 %v1993, %v2096
  %v2098 = vpop.f32.mrb[0].mxu0
  %2099 = vmatprep.mubr.bf16.mxu0 0
  %2100 = vmatmul.mubr.bf16.gmra.mrb[0].mxu0 %v1967
  %v2101 = vpop.f32.mrb[0].mxu0
  %v2102 = vadd.f32 %v1993, %v2101
  %v2103 = vpop.f32.mrb[0].mxu0
  %v2104 = vpop.f32.mrb[0].mxu0
  %v2105 = vadd.f32 %v1993, %v2104
  %v2106 = vpop.f32.mrb[0].mxu0
  %2107 = vmatprep.mubr.bf16.mxu0 0
  %2108 = vmatmul.mubr.bf16.gmra.mrb[0].mxu0 %v1968
  %v2109 = vpop.f32.mrb[0].mxu0
  %v2110 = vadd.f32 %v1993, %v2109
  %v2111 = vpop.f32.mrb[0].mxu0
  %v2112 = vpop.f32.mrb[0].mxu0
  %v2113 = vadd.f32 %v1993, %v2112
  %v2114 = vpop.f32.mrb[0].mxu0
  %2115 = vmatprep.mubr.bf16.mxu0 0
  %2116 = vmatmul.mubr.bf16.gmra.mrb[0].mxu0 %v1969
  %v2117 = vpop.f32.mrb[0].mxu0
  %v2118 = vadd.f32 %v1993, %v2117
  %v2119 = vpop.f32.mrb[0].mxu0
  %v2120 = vpop.f32.mrb[0].mxu0
  %v2121 = vadd.f32 %v1993, %v2120
  %v2122 = vpop.f32.mrb[0].mxu0
  %2123 = vmatprep.mubr.bf16.mxu0 0
  %2124 = vmatmul.mubr.bf16.gmra.mrb[0].mxu0 %v1970
  %v2125 = vpop.f32.mrb[0].mxu0
  %v2126 = vadd.f32 %v1993, %v2125
  %v2127 = vpop.f32.mrb[0].mxu0
  %v2128 = vpop.f32.mrb[0].mxu0
  %v2129 = vadd.f32 %v1993, %v2128
  %v2130 = vpop.f32.mrb[0].mxu0
  %2131 = vmatprep.mubr.bf16.mxu0 0
  %2132 = vmatmul.mubr.bf16.gmra.mrb[0].mxu0 %v1971
  %v2133 = vpop.f32.mrb[0].mxu0
  %v2134 = vadd.f32 %v1993, %v2133
  %v2135 = vpop.f32.mrb[0].mxu0
  %v2136 = vpop.f32.mrb[0].mxu0
  %v2137 = vadd.f32 %v1993, %v2136
  %v2138 = vpop.f32.mrb[0].mxu0
  %2139 = vdwg.mxu0
  %v2140 = vsel %vm807, %v2078, -inf
  %2141 = vmax.xlane.f32.xlu0 %v2140
  %v2142 = vpop.xlane.xlu0 %2141
  %v2143 = vsel %vm807, %v2081, -inf
  %2144 = vmax.xlane.f32.xlu0 %v2143
  %v2145 = vpop.xlane.xlu0 %2144
  %v2146 = vsel %vm807, %v2086, -inf
  %2147 = vmax.xlane.f32.xlu0 %v2146
  %v2148 = vpop.xlane.xlu0 %2147
  %v2149 = vsel %vm807, %v2089, -inf
  %2150 = vmax.xlane.f32.xlu0 %v2149
  %v2151 = vpop.xlane.xlu0 %2150
  %v2152 = vsel %vm807, %v2094, -inf
  %2153 = vmax.xlane.f32.xlu0 %v2152
  %v2154 = vpop.xlane.xlu0 %2153
  %v2155 = vsel %vm807, %v2097, -inf
  %2156 = vmax.xlane.f32.xlu0 %v2155
  %v2157 = vpop.xlane.xlu0 %2156
  %v2158 = vsel %vm807, %v2102, -inf
  %2159 = vmax.xlane.f32.xlu0 %v2158
  %v2160 = vpop.xlane.xlu0 %2159
  %v2161 = vsel %vm807, %v2105, -inf
  %2162 = vmax.xlane.f32.xlu0 %v2161
  %v2163 = vpop.xlane.xlu0 %2162
  %v2164 = vsel %vm807, %v2110, -inf
  %2165 = vmax.xlane.f32.xlu0 %v2164
  %v2166 = vpop.xlane.xlu0 %2165
  %v2167 = vsel %vm807, %v2113, -inf
  %2168 = vmax.xlane.f32.xlu0 %v2167
  %v2169 = vpop.xlane.xlu0 %2168
  %v2170 = vsel %vm807, %v2118, -inf
  %2171 = vmax.xlane.f32.xlu0 %v2170
  %v2172 = vpop.xlane.xlu0 %2171
  %v2173 = vsel %vm807, %v2121, -inf
  %2174 = vmax.xlane.f32.xlu0 %v2173
  %v2175 = vpop.xlane.xlu0 %2174
  %v2176 = vsel %vm807, %v2126, -inf
  %2177 = vmax.xlane.f32.xlu0 %v2176
  %v2178 = vpop.xlane.xlu0 %2177
  %v2179 = vsel %vm807, %v2129, -inf
  %2180 = vmax.xlane.f32.xlu0 %v2179
  %v2181 = vpop.xlane.xlu0 %2180
  %v2182 = vsel %vm807, %v2134, -inf
  %2183 = vmax.xlane.f32.xlu0 %v2182
  %v2184 = vpop.xlane.xlu0 %2183
  %v2185 = vsel %vm807, %v2137, -inf
  %2186 = vmax.xlane.f32.xlu0 %v2185
  %v2187 = vpop.xlane.xlu0 %2186
  %v2188 = vsub.f32 %v2078, %v2142
  %v2189 = vsub.f32 %v2081, %v2145
  %v2190 = vsub.f32 %v2086, %v2148
  %v2191 = vsub.f32 %v2089, %v2151
  %v2192 = vsub.f32 %v2094, %v2154
  %v2193 = vsub.f32 %v2097, %v2157
  %v2194 = vsub.f32 %v2102, %v2160
  %v2195 = vsub.f32 %v2105, %v2163
  %v2196 = vsub.f32 %v2110, %v2166
  %v2197 = vsub.f32 %v2113, %v2169
  %v2198 = vsub.f32 %v2118, %v2172
  %v2199 = vsub.f32 %v2121, %v2175
  %v2200 = vsub.f32 %v2126, %v2178
  %v2201 = vsub.f32 %v2129, %v2181
  %v2202 = vsub.f32 %v2134, %v2184
  %v2203 = vsub.f32 %v2137, %v2187
  %v2204 = vmul.f32 %v2188, 1.442695
  %v2205 = vpow.pop %v2204
  %v2206 = vmul.f32 %v2189, 1.442695
  %v2207 = vpow.pop %v2206
  %v2208 = vmul.f32 %v2190, 1.442695
  %v2209 = vpow.pop %v2208
  %v2210 = vmul.f32 %v2191, 1.442695
  %v2211 = vpow.pop %v2210
  %v2212 = vmul.f32 %v2192, 1.442695
  %v2213 = vpow.pop %v2212
  %v2214 = vmul.f32 %v2193, 1.442695
  %v2215 = vpow.pop %v2214
  %v2216 = vmul.f32 %v2194, 1.442695
  %v2217 = vpow.pop %v2216
  %v2218 = vmul.f32 %v2195, 1.442695
  %v2219 = vpow.pop %v2218
  %v2220 = vmul.f32 %v2196, 1.442695
  %v2221 = vpow.pop %v2220
  %v2222 = vmul.f32 %v2197, 1.442695
  %v2223 = vpow.pop %v2222
  %v2224 = vmul.f32 %v2198, 1.442695
  %v2225 = vpow.pop %v2224
  %v2226 = vmul.f32 %v2199, 1.442695
  %v2227 = vpow.pop %v2226
  %v2228 = vmul.f32 %v2200, 1.442695
  %v2229 = vpow.pop %v2228
  %v2230 = vmul.f32 %v2201, 1.442695
  %v2231 = vpow.pop %v2230
  %v2232 = vmul.f32 %v2202, 1.442695
  %v2233 = vpow.pop %v2232
  %v2234 = vmul.f32 %v2203, 1.442695
  %v2235 = vpow.pop %v2234
  %v2236 = vsel %vm807, %v2205, 0.0
  %2237 = vadd.xlane.f32.xlu0 %v2236
  %v2238 = vpop.xlane.xlu0 %2237
  %v2239 = vsel %vm807, %v2207, 0.0
  %2240 = vadd.xlane.f32.xlu0 %v2239
  %v2241 = vpop.xlane.xlu0 %2240
  %v2242 = vsel %vm807, %v2209, 0.0
  %2243 = vadd.xlane.f32.xlu0 %v2242
  %v2244 = vpop.xlane.xlu0 %2243
  %v2245 = vsel %vm807, %v2211, 0.0
  %2246 = vadd.xlane.f32.xlu0 %v2245
  %v2247 = vpop.xlane.xlu0 %2246
  %v2248 = vsel %vm807, %v2213, 0.0
  %2249 = vadd.xlane.f32.xlu0 %v2248
  %v2250 = vpop.xlane.xlu0 %2249
  %v2251 = vsel %vm807, %v2215, 0.0
  %2252 = vadd.xlane.f32.xlu0 %v2251
  %v2253 = vpop.xlane.xlu0 %2252
  %v2254 = vsel %vm807, %v2217, 0.0
  %2255 = vadd.xlane.f32.xlu0 %v2254
  %v2256 = vpop.xlane.xlu0 %2255
  %v2257 = vsel %vm807, %v2219, 0.0
  %2258 = vadd.xlane.f32.xlu0 %v2257
  %v2259 = vpop.xlane.xlu0 %2258
  %v2260 = vsel %vm807, %v2221, 0.0
  %2261 = vadd.xlane.f32.xlu0 %v2260
  %v2262 = vpop.xlane.xlu0 %2261
  %v2263 = vsel %vm807, %v2223, 0.0
  %2264 = vadd.xlane.f32.xlu0 %v2263
  %v2265 = vpop.xlane.xlu0 %2264
  %v2266 = vsel %vm807, %v2225, 0.0
  %2267 = vadd.xlane.f32.xlu0 %v2266
  %v2268 = vpop.xlane.xlu0 %2267
  %v2269 = vsel %vm807, %v2227, 0.0
  %2270 = vadd.xlane.f32.xlu0 %v2269
  %v2271 = vpop.xlane.xlu0 %2270
  %v2272 = vsel %vm807, %v2229, 0.0
  %2273 = vadd.xlane.f32.xlu0 %v2272
  %v2274 = vpop.xlane.xlu0 %2273
  %v2275 = vsel %vm807, %v2231, 0.0
  %2276 = vadd.xlane.f32.xlu0 %v2275
  %v2277 = vpop.xlane.xlu0 %2276
  %v2278 = vsel %vm807, %v2233, 0.0
  %2279 = vadd.xlane.f32.xlu0 %v2278
  %v2280 = vpop.xlane.xlu0 %2279
  %v2281 = vsel %vm807, %v2235, 0.0
  %2282 = vadd.xlane.f32.xlu0 %v2281
  %v2283 = vpop.xlane.xlu0 %2282
  %v2284 = vlog2.pop %v2238
  %v2285 = vmul.f32 %v2284, 0.6931472
  %v2286 = vlog2.pop %v2241
  %v2287 = vmul.f32 %v2286, 0.6931472
  %v2288 = vlog2.pop %v2244
  %v2289 = vmul.f32 %v2288, 0.6931472
  %v2290 = vlog2.pop %v2247
  %v2291 = vmul.f32 %v2290, 0.6931472
  %v2292 = vlog2.pop %v2250
  %v2293 = vmul.f32 %v2292, 0.6931472
  %v2294 = vlog2.pop %v2253
  %v2295 = vmul.f32 %v2294, 0.6931472
  %v2296 = vlog2.pop %v2256
  %v2297 = vmul.f32 %v2296, 0.6931472
  %v2298 = vlog2.pop %v2259
  %v2299 = vmul.f32 %v2298, 0.6931472
  %v2300 = vlog2.pop %v2262
  %v2301 = vmul.f32 %v2300, 0.6931472
  %v2302 = vlog2.pop %v2265
  %v2303 = vmul.f32 %v2302, 0.6931472
  %v2304 = vlog2.pop %v2268
  %v2305 = vmul.f32 %v2304, 0.6931472
  %v2306 = vlog2.pop %v2271
  %v2307 = vmul.f32 %v2306, 0.6931472
  %v2308 = vlog2.pop %v2274
  %v2309 = vmul.f32 %v2308, 0.6931472
  %v2310 = vlog2.pop %v2277
  %v2311 = vmul.f32 %v2310, 0.6931472
  %v2312 = vlog2.pop %v2280
  %v2313 = vmul.f32 %v2312, 0.6931472
  %v2314 = vlog2.pop %v2283
  %v2315 = vmul.f32 %v2314, 0.6931472
  %v2316 = vsub.f32 %v2188, %v2285
  %v2317 = vsub.f32 %v2189, %v2287
  %v2318 = vsub.f32 %v2190, %v2289
  %v2319 = vsub.f32 %v2191, %v2291
  %v2320 = vsub.f32 %v2192, %v2293
  %v2321 = vsub.f32 %v2193, %v2295
  %v2322 = vsub.f32 %v2194, %v2297
  %v2323 = vsub.f32 %v2195, %v2299
  %v2324 = vsub.f32 %v2196, %v2301
  %v2325 = vsub.f32 %v2197, %v2303
  %v2326 = vsub.f32 %v2198, %v2305
  %v2327 = vsub.f32 %v2199, %v2307
  %v2328 = vsub.f32 %v2200, %v2309
  %v2329 = vsub.f32 %v2201, %v2311
  %v2330 = vsub.f32 %v2202, %v2313
  %v2331 = vsub.f32 %v2203, %v2315
  %2332 = vst.msk [vmem:[%s11] sm:$0xff] %vm807, %v2316
  %2333 = vst.msk [vmem:[%s11 + $0x8] sm:$0xff] %vm807, %v2317
  %2334 = vst.msk [vmem:[%s11 + $0x10] sm:$0xff] %vm807, %v2318
  %2335 = vst.msk [vmem:[%s11 + $0x18] sm:$0xff] %vm807, %v2319
  %2336 = vst.msk [vmem:[%s11 + $0x20] sm:$0xff] %vm807, %v2320
  %2337 = vst.msk [vmem:[%s11 + $0x28] sm:$0xff] %vm807, %v2321
  %2338 = vst.msk [vmem:[%s11 + $0x30] sm:$0xff] %vm807, %v2322
  %2339 = vst.msk [vmem:[%s11 + $0x38] sm:$0xff] %vm807, %v2323
  %2340 = vst.msk [vmem:[%s11 + $0x40] sm:$0xff] %vm807, %v2324
  %2341 = vst.msk [vmem:[%s11 + $0x48] sm:$0xff] %vm807, %v2325
  %2342 = vst.msk [vmem:[%s11 + $0x50] sm:$0xff] %vm807, %v2326
  %2343 = vst.msk [vmem:[%s11 + $0x58] sm:$0xff] %vm807, %v2327
  %2344 = vst.msk [vmem:[%s11 + $0x60] sm:$0xff] %vm807, %v2328
  %2345 = vst.msk [vmem:[%s11 + $0x68] sm:$0xff] %vm807, %v2329
  %2346 = vst.msk [vmem:[%s11 + $0x70] sm:$0xff] %vm807, %v2330
  %2347 = vst.msk [vmem:[%s11 + $0x78] sm:$0xff] %vm807, %v2331
  // Predicated region
  $region46: #{mnist_classifier_forward.1} parent=0 // pred_check
    _
  $region47: #{mnist_classifier_forward.1} parent=0 // pred_check_branch
    %2349 = sbr.rel (0) target = $region49
  $region48: #{mnist_classifier_forward.1} parent=0 // pred_region
    _
  $region49: #{mnist_classifier_forward.1} parent=0 // pred_fallthru
    _
  // Predicated region
  $region50: #{mnist_classifier_forward.1} parent=0 // pred_check
    _
  $region51: #{mnist_classifier_forward.1} parent=0 // pred_check_branch
    %2351 = sbr.rel (0) target = $region53
  $region52: #{mnist_classifier_forward.1} parent=0 // pred_region
    _
  $region53: #{mnist_classifier_forward.1} parent=0 // pred_fallthru
    _

</llo_original>
